<compile_context>
chip_gen: v7x
topology: tpu7x:2x2x1
jax: 0.10.0
libtpu: 0.0.40
codegen_flags: <defaults>
</compile_context>

<pallas_src>
import functools

import jax
import jax.numpy as jnp
from jax import lax
from jax.experimental import pallas as pl
from jax.experimental.pallas import tpu as pltpu


def _round_up(x, m):
    return ((x + m - 1) // m) * m


def _make_glu_conv_kernel(k):
    """Kernel: accumulate k per-tap matmuls for both GLU halves, then GLU."""

    def kernel(*refs):
        x_refs = refs[:k]                                   # k x (TILE_R, Cp) bf16
        wa_ref, wg_ref, ba_ref, bg_ref, o_ref = refs[k:]
        tile_r = o_ref.shape[0]
        coutp = o_ref.shape[1]

        acc_a = jnp.zeros((tile_r, coutp), jnp.float32)
        acc_g = jnp.zeros((tile_r, coutp), jnp.float32)
        for j in range(k):                                  # static unroll over taps
            xj = x_refs[j][...]                             # bf16 tile
            acc_a = acc_a + jnp.dot(xj, wa_ref[j],
                                    preferred_element_type=jnp.float32)
            acc_g = acc_g + jnp.dot(xj, wg_ref[j],
                                    preferred_element_type=jnp.float32)

        a = acc_a + ba_ref[...]
        g = acc_g + bg_ref[...]
        o_ref[...] = (a * jax.nn.sigmoid(g)).astype(o_ref.dtype)

    return kernel


def _glu_conv_layer(x_btc, weight, bias, k, *, tile_r=256):
    """One Conv1d(stride=2, pad=k//2) + GLU layer.

    x_btc : (B, T, C_in) float32, channels-last.
    weight: (2*C_out, C_in, k)   (PyTorch Conv1d layout)
    bias  : (2*C_out,)
    returns (B, T_out, C_out) float32.
    """
    B, T, c_in = x_btc.shape
    pad = k // 2
    t_out = (T + 2 * pad - k) // 2 + 1
    R = B * t_out

    cout2 = weight.shape[0]
    cout = cout2 // 2
    cp = _round_up(c_in, 128)          # lane-aligned contraction dim
    coutp = _round_up(cout, 128)       # lane-dense output dim

    tile_r = min(tile_r, _round_up(R, 8))
    r_pad = _round_up(R, tile_r)

    # --- per-tap shifted strided windows of the time-padded input (no im2col slab)
    xp = jnp.pad(x_btc, ((0, 0), (pad, pad), (0, 0)))
    taps = []
    for j in range(k):
        tj = lax.slice(xp, (0, j, 0),
                       (B, j + 2 * (t_out - 1) + 1, c_in),
                       (1, 2, 1))                            # (B, T_out, C_in)
        tj = tj.reshape(R, c_in)
        tj = jnp.pad(tj, ((0, r_pad - R), (0, cp - c_in))).astype(jnp.bfloat16)
        taps.append(tj)

    # --- weights: split GLU halves, per-tap (C_in, C_out), pad, cast to bf16
    w = weight.astype(jnp.float32)
    wa = jnp.transpose(w[:cout], (2, 1, 0))                  # (k, C_in, C_out)
    wg = jnp.transpose(w[cout:], (2, 1, 0))
    wa = jnp.pad(wa, ((0, 0), (0, cp - c_in), (0, coutp - cout))).astype(jnp.bfloat16)
    wg = jnp.pad(wg, ((0, 0), (0, cp - c_in), (0, coutp - cout))).astype(jnp.bfloat16)

    b = bias.astype(jnp.float32)
    ba = jnp.pad(b[:cout], (0, coutp - cout)).reshape(1, coutp)
    bg = jnp.pad(b[cout:], (0, coutp - cout)).reshape(1, coutp)

    grid = (r_pad // tile_r,)
    x_spec = pl.BlockSpec((tile_r, cp), lambda i: (i, 0))    # pipelined over row tiles
    in_specs = [x_spec] * k + [
        pl.BlockSpec((k, cp, coutp), lambda i: (0, 0, 0)),   # W_a: VMEM-resident
        pl.BlockSpec((k, cp, coutp), lambda i: (0, 0, 0)),   # W_g: VMEM-resident
        pl.BlockSpec((1, coutp), lambda i: (0, 0)),          # bias_a
        pl.BlockSpec((1, coutp), lambda i: (0, 0)),          # bias_g
    ]

    out = pl.pallas_call(
        _make_glu_conv_kernel(k),
        out_shape=jax.ShapeDtypeStruct((r_pad, coutp), jnp.float32),
        grid=grid,
        in_specs=in_specs,
        out_specs=pl.BlockSpec((tile_r, coutp), lambda i: (i, 0)),
        compiler_params=pltpu.CompilerParams(
            dimension_semantics=("parallel",),               # 2-TC split on v7x
        ),
    )(*taps, wa, wg, ba, bg)

    return out[:R, :cout].reshape(B, t_out, cout)


@functools.partial(jax.jit, static_argnames=("kernel_sizes", "tile_r"))
def conv1d_subsampler_forward(src_tokens, src_lengths, params, kernel_sizes,
                              *, tile_r=256):
    """src_tokens: (B, T, C_in) float32; src_lengths: (B,) int32.
    params: list of (weight (2*C_out, C_in_layer, k), bias (2*C_out,)) per layer."""
    x = src_tokens.astype(jnp.float32)
    for (w, b), k in zip(params, kernel_sizes):
        x = _glu_conv_layer(x, w, b, k, tile_r=tile_r)
    # (B, T_out, C_out) -> (T_out, B, C_out)  (matches .transpose(1,2).transpose(0,1))
    x = jnp.transpose(x, (1, 0, 2))
    out_lens = src_lengths
    for _ in range(len(kernel_sizes)):
        out_lens = jnp.floor((out_lens.astype(jnp.float32) - 1.0) / 2.0 + 1.0).astype(jnp.int32)
    return x, out_lens


def _reference_forward(src_tokens, src_lengths, params, kernel_sizes):
    # Pure-JAX f32 reference of the PyTorch forward (NCW conv + GLU on channels).
    x = jnp.transpose(src_tokens.astype(jnp.float32), (0, 2, 1))  # (B, C, T)
    for (w, b), k in zip(params, kernel_sizes):
        pad = k // 2
        y = lax.conv_general_dilated(
            x, w.astype(jnp.float32), window_strides=(2,), padding=[(pad, pad)],
            dimension_numbers=("NCH", "OIH", "NCH"))
        y = y + b.astype(jnp.float32)[None, :, None]
        c = y.shape[1] // 2
        x = y[:, :c, :] * jax.nn.sigmoid(y[:, c:, :])
    x = jnp.transpose(x, (2, 0, 1))  # (T_out, B, C_out)
    out_lens = src_lengths
    for _ in range(len(kernel_sizes)):
        out_lens = jnp.floor((out_lens.astype(jnp.float32) - 1.0) / 2.0 + 1.0).astype(jnp.int32)
    return x, out_lens


if __name__ == "__main__":
    # Module config (small, consistent with the PyTorch module's __init__).
    in_channels, mid_channels, out_channels = 8, 16, 8
    kernel_sizes = (3, 3)
    bsz, in_seq_len = 2, 16

    key = jax.random.PRNGKey(0)
    k_x, k_w0, k_b0, k_w1, k_b1 = jax.random.split(key, 5)

    # Deterministic synthetic parameters (same shapes nn.Conv1d would create).
    # layer 0: Conv1d(in_channels -> mid_channels, k=3)
    w0 = 0.1 * jax.random.normal(k_w0, (mid_channels, in_channels, kernel_sizes[0]), jnp.float32)
    b0 = 0.1 * jax.random.normal(k_b0, (mid_channels,), jnp.float32)
    # layer 1: Conv1d(mid_channels//2 -> out_channels*2, k=3)
    w1 = 0.1 * jax.random.normal(k_w1, (out_channels * 2, mid_channels // 2, kernel_sizes[1]), jnp.float32)
    b1 = 0.1 * jax.random.normal(k_b1, (out_channels * 2,), jnp.float32)
    params = [(w0, b0), (w1, b1)]

    src_tokens = jax.random.normal(k_x, (bsz, in_seq_len, in_channels), jnp.float32)
    src_lengths = jnp.array([16, 12], dtype=jnp.int32)

    x_out, len_out = conv1d_subsampler_forward(src_tokens, src_lengths, params, kernel_sizes)
    x_out = jax.block_until_ready(x_out)
    len_out = jax.block_until_ready(len_out)

    # Sanity check against a pure-JAX f32 reference of the PyTorch forward.
    # (bf16 MXU inputs -> looser tolerance than the pure-f32 v1.)
    x_ref, len_ref = _reference_forward(src_tokens, src_lengths, params, kernel_sizes)
    assert x_out.shape == x_ref.shape, (x_out.shape, x_ref.shape)
    assert jnp.allclose(x_out, x_ref, atol=2e-2, rtol=2e-2), float(jnp.max(jnp.abs(x_out - x_ref)))
    assert jnp.array_equal(len_out, len_ref)

    print("KERNEL_OK")
</pallas_src>

<mosaic_0001>
module attributes {stable_mosaic.version = 11 : i64} {
  func.func @kernel(%arg0: i32, %arg1: memref<16x128xbf16, #tpu.memory_space<vmem>>, %arg2: memref<16x128xbf16, #tpu.memory_space<vmem>>, %arg3: memref<16x128xbf16, #tpu.memory_space<vmem>>, %arg4: memref<3x128x128xbf16, #tpu.memory_space<vmem>>, %arg5: memref<3x128x128xbf16, #tpu.memory_space<vmem>>, %arg6: memref<1x128xf32, #tpu.memory_space<vmem>>, %arg7: memref<1x128xf32, #tpu.memory_space<vmem>>, %arg8: memref<16x128xf32, #tpu.memory_space<vmem>>) attributes {dimension_semantics = [#tpu.dimension_semantics<parallel>], iteration_bounds = array<i64: 1>, scalar_prefetch = 0 : i64, scratch_operands = 0 : i64, tpu.core_type = #tpu.core_type<tc>, window_params = [{transform_indices = @transform_0, window_bounds = array<i64: 16, 128>}, {transform_indices = @transform_1, window_bounds = array<i64: 16, 128>}, {transform_indices = @transform_2, window_bounds = array<i64: 16, 128>}, {pipeline_mode = #tpu.pipeline_mode<synchronous>, transform_indices = @transform_3, window_bounds = array<i64: 3, 128, 128>}, {pipeline_mode = #tpu.pipeline_mode<synchronous>, transform_indices = @transform_4, window_bounds = array<i64: 3, 128, 128>}, {pipeline_mode = #tpu.pipeline_mode<synchronous>, transform_indices = @transform_5, window_bounds = array<i64: 1, 128>}, {pipeline_mode = #tpu.pipeline_mode<synchronous>, transform_indices = @transform_6, window_bounds = array<i64: 1, 128>}, {transform_indices = @transform_7, window_bounds = array<i64: 16, 128>}]} {
    %cst = arith.constant 0.000000e+00 : f32
    %0 = vector.broadcast %cst : f32 to vector<16x128xf32>
    %cst_0 = arith.constant 0.000000e+00 : f32
    %1 = vector.broadcast %cst_0 : f32 to vector<16x128xf32>
    %c0 = arith.constant 0 : index
    %c0_1 = arith.constant 0 : index
    %2 = vector.load %arg1[%c0, %c0_1] : memref<16x128xbf16, #tpu.memory_space<vmem>>, vector<16x128xbf16>
    %c0_2 = arith.constant 0 : index
    %c0_3 = arith.constant 0 : index
    %c0_4 = arith.constant 0 : index
    %3 = vector.load %arg4[%c0_2, %c0_3, %c0_4] : memref<3x128x128xbf16, #tpu.memory_space<vmem>>, vector<1x128x128xbf16>
    %4 = vector.shape_cast %3 : vector<1x128x128xbf16> to vector<128x128xbf16>
    %cst_5 = arith.constant dense<0.000000e+00> : vector<16x128xf32>
    %5 = tpu.matmul %2, %4, %cst_5 {dimension_numbers = #tpu.dot_dimension_numbers<[1], [0], [0], [1], [0, 0, 1, 1], [], []>} : vector<16x128xbf16>, vector<128x128xbf16>, vector<16x128xf32> -> vector<16x128xf32>
    %6 = arith.addf %0, %5 : vector<16x128xf32>
    %c0_6 = arith.constant 0 : index
    %c0_7 = arith.constant 0 : index
    %c0_8 = arith.constant 0 : index
    %7 = vector.load %arg5[%c0_6, %c0_7, %c0_8] : memref<3x128x128xbf16, #tpu.memory_space<vmem>>, vector<1x128x128xbf16>
    %8 = vector.shape_cast %7 : vector<1x128x128xbf16> to vector<128x128xbf16>
    %cst_9 = arith.constant dense<0.000000e+00> : vector<16x128xf32>
    %9 = tpu.matmul %2, %8, %cst_9 {dimension_numbers = #tpu.dot_dimension_numbers<[1], [0], [0], [1], [0, 0, 1, 1], [], []>} : vector<16x128xbf16>, vector<128x128xbf16>, vector<16x128xf32> -> vector<16x128xf32>
    %10 = arith.addf %1, %9 : vector<16x128xf32>
    %c0_10 = arith.constant 0 : index
    %c0_11 = arith.constant 0 : index
    %11 = vector.load %arg2[%c0_10, %c0_11] : memref<16x128xbf16, #tpu.memory_space<vmem>>, vector<16x128xbf16>
    %c1 = arith.constant 1 : index
    %c0_12 = arith.constant 0 : index
    %c0_13 = arith.constant 0 : index
    %12 = vector.load %arg4[%c1, %c0_12, %c0_13] : memref<3x128x128xbf16, #tpu.memory_space<vmem>>, vector<1x128x128xbf16>
    %13 = vector.shape_cast %12 : vector<1x128x128xbf16> to vector<128x128xbf16>
    %cst_14 = arith.constant dense<0.000000e+00> : vector<16x128xf32>
    %14 = tpu.matmul %11, %13, %cst_14 {dimension_numbers = #tpu.dot_dimension_numbers<[1], [0], [0], [1], [0, 0, 1, 1], [], []>} : vector<16x128xbf16>, vector<128x128xbf16>, vector<16x128xf32> -> vector<16x128xf32>
    %15 = arith.addf %6, %14 : vector<16x128xf32>
    %c1_15 = arith.constant 1 : index
    %c0_16 = arith.constant 0 : index
    %c0_17 = arith.constant 0 : index
    %16 = vector.load %arg5[%c1_15, %c0_16, %c0_17] : memref<3x128x128xbf16, #tpu.memory_space<vmem>>, vector<1x128x128xbf16>
    %17 = vector.shape_cast %16 : vector<1x128x128xbf16> to vector<128x128xbf16>
    %cst_18 = arith.constant dense<0.000000e+00> : vector<16x128xf32>
    %18 = tpu.matmul %11, %17, %cst_18 {dimension_numbers = #tpu.dot_dimension_numbers<[1], [0], [0], [1], [0, 0, 1, 1], [], []>} : vector<16x128xbf16>, vector<128x128xbf16>, vector<16x128xf32> -> vector<16x128xf32>
    %19 = arith.addf %10, %18 : vector<16x128xf32>
    %c0_19 = arith.constant 0 : index
    %c0_20 = arith.constant 0 : index
    %20 = vector.load %arg3[%c0_19, %c0_20] : memref<16x128xbf16, #tpu.memory_space<vmem>>, vector<16x128xbf16>
    %c2 = arith.constant 2 : index
    %c0_21 = arith.constant 0 : index
    %c0_22 = arith.constant 0 : index
    %21 = vector.load %arg4[%c2, %c0_21, %c0_22] : memref<3x128x128xbf16, #tpu.memory_space<vmem>>, vector<1x128x128xbf16>
    %22 = vector.shape_cast %21 : vector<1x128x128xbf16> to vector<128x128xbf16>
    %cst_23 = arith.constant dense<0.000000e+00> : vector<16x128xf32>
    %23 = tpu.matmul %20, %22, %cst_23 {dimension_numbers = #tpu.dot_dimension_numbers<[1], [0], [0], [1], [0, 0, 1, 1], [], []>} : vector<16x128xbf16>, vector<128x128xbf16>, vector<16x128xf32> -> vector<16x128xf32>
    %24 = arith.addf %15, %23 : vector<16x128xf32>
    %c2_24 = arith.constant 2 : index
    %c0_25 = arith.constant 0 : index
    %c0_26 = arith.constant 0 : index
    %25 = vector.load %arg5[%c2_24, %c0_25, %c0_26] : memref<3x128x128xbf16, #tpu.memory_space<vmem>>, vector<1x128x128xbf16>
    %26 = vector.shape_cast %25 : vector<1x128x128xbf16> to vector<128x128xbf16>
    %cst_27 = arith.constant dense<0.000000e+00> : vector<16x128xf32>
    %27 = tpu.matmul %20, %26, %cst_27 {dimension_numbers = #tpu.dot_dimension_numbers<[1], [0], [0], [1], [0, 0, 1, 1], [], []>} : vector<16x128xbf16>, vector<128x128xbf16>, vector<16x128xf32> -> vector<16x128xf32>
    %28 = arith.addf %19, %27 : vector<16x128xf32>
    %c0_28 = arith.constant 0 : index
    %c0_29 = arith.constant 0 : index
    %29 = vector.load %arg6[%c0_28, %c0_29] : memref<1x128xf32, #tpu.memory_space<vmem>>, vector<1x128xf32>
    %30 = vector.broadcast %29 : vector<1x128xf32> to vector<16x128xf32>
    %31 = arith.addf %24, %30 : vector<16x128xf32>
    %c0_30 = arith.constant 0 : index
    %c0_31 = arith.constant 0 : index
    %32 = vector.load %arg7[%c0_30, %c0_31] : memref<1x128xf32, #tpu.memory_space<vmem>>, vector<1x128xf32>
    %33 = vector.broadcast %32 : vector<1x128xf32> to vector<16x128xf32>
    %34 = arith.addf %28, %33 : vector<16x128xf32>
    %35 = arith.negf %34 : vector<16x128xf32>
    %36 = math.exp %35 : vector<16x128xf32>
    %cst_32 = arith.constant 1.000000e+00 : f32
    %37 = vector.broadcast %cst_32 : f32 to vector<16x128xf32>
    %38 = arith.addf %37, %36 : vector<16x128xf32>
    %39 = arith.divf %37, %38 : vector<16x128xf32>
    %40 = arith.mulf %31, %39 : vector<16x128xf32>
    %c0_33 = arith.constant 0 : index
    %c0_34 = arith.constant 0 : index
    %41 = vector.load %arg8[%c0_33, %c0_34] : memref<16x128xf32, #tpu.memory_space<vmem>>, vector<16x128xf32>
    tpu.vector_store %arg8[%c0_33, %c0_34], %40 {strides = array<i32>} : memref<16x128xf32, #tpu.memory_space<vmem>>, vector<16x128xf32>,
    return
  }
  func.func @transform_0(%arg0: i32) -> (i32, i32) {
    %c0_i32 = arith.constant 0 : i32
    %c0_i32_0 = arith.constant 0 : i32
    return %arg0, %c0_i32 : i32, i32
  }
  func.func @transform_1(%arg0: i32) -> (i32, i32) {
    %c0_i32 = arith.constant 0 : i32
    %c0_i32_0 = arith.constant 0 : i32
    return %arg0, %c0_i32 : i32, i32
  }
  func.func @transform_2(%arg0: i32) -> (i32, i32) {
    %c0_i32 = arith.constant 0 : i32
    %c0_i32_0 = arith.constant 0 : i32
    return %arg0, %c0_i32 : i32, i32
  }
  func.func @transform_3(%arg0: i32) -> (i32, i32, i32) {
    %c0_i32 = arith.constant 0 : i32
    %c0_i32_0 = arith.constant 0 : i32
    %c0_i32_1 = arith.constant 0 : i32
    %c0_i32_2 = arith.constant 0 : i32
    return %c0_i32, %c0_i32_0, %c0_i32_1 : i32, i32, i32
  }
  func.func @transform_4(%arg0: i32) -> (i32, i32, i32) {
    %c0_i32 = arith.constant 0 : i32
    %c0_i32_0 = arith.constant 0 : i32
    %c0_i32_1 = arith.constant 0 : i32
    %c0_i32_2 = arith.constant 0 : i32
    return %c0_i32, %c0_i32_0, %c0_i32_1 : i32, i32, i32
  }
  func.func @transform_5(%arg0: i32) -> (i32, i32) {
    %c0_i32 = arith.constant 0 : i32
    %c0_i32_0 = arith.constant 0 : i32
    %c0_i32_1 = arith.constant 0 : i32
    return %c0_i32, %c0_i32_0 : i32, i32
  }
  func.func @transform_6(%arg0: i32) -> (i32, i32) {
    %c0_i32 = arith.constant 0 : i32
    %c0_i32_0 = arith.constant 0 : i32
    %c0_i32_1 = arith.constant 0 : i32
    return %c0_i32, %c0_i32_0 : i32, i32
  }
  func.func @transform_7(%arg0: i32) -> (i32, i32) {
    %c0_i32 = arith.constant 0 : i32
    %c0_i32_0 = arith.constant 0 : i32
    return %arg0, %c0_i32 : i32, i32
  }
}

module attributes {stable_mosaic.version = 11 : i64} {
  func.func @kernel(%arg0: i32, %arg1: memref<8x128xbf16, #tpu.memory_space<vmem>>, %arg2: memref<8x128xbf16, #tpu.memory_space<vmem>>, %arg3: memref<8x128xbf16, #tpu.memory_space<vmem>>, %arg4: memref<3x128x128xbf16, #tpu.memory_space<vmem>>, %arg5: memref<3x128x128xbf16, #tpu.memory_space<vmem>>, %arg6: memref<1x128xf32, #tpu.memory_space<vmem>>, %arg7: memref<1x128xf32, #tpu.memory_space<vmem>>, %arg8: memref<8x128xf32, #tpu.memory_space<vmem>>) attributes {dimension_semantics = [#tpu.dimension_semantics<parallel>], iteration_bounds = array<i64: 1>, scalar_prefetch = 0 : i64, scratch_operands = 0 : i64, tpu.core_type = #tpu.core_type<tc>, window_params = [{transform_indices = @transform_0, window_bounds = array<i64: 8, 128>}, {transform_indices = @transform_1, window_bounds = array<i64: 8, 128>}, {transform_indices = @transform_2, window_bounds = array<i64: 8, 128>}, {pipeline_mode = #tpu.pipeline_mode<synchronous>, transform_indices = @transform_3, window_bounds = array<i64: 3, 128, 128>}, {pipeline_mode = #tpu.pipeline_mode<synchronous>, transform_indices = @transform_4, window_bounds = array<i64: 3, 128, 128>}, {pipeline_mode = #tpu.pipeline_mode<synchronous>, transform_indices = @transform_5, window_bounds = array<i64: 1, 128>}, {pipeline_mode = #tpu.pipeline_mode<synchronous>, transform_indices = @transform_6, window_bounds = array<i64: 1, 128>}, {transform_indices = @transform_7, window_bounds = array<i64: 8, 128>}]} {
    %cst = arith.constant 0.000000e+00 : f32
    %0 = vector.broadcast %cst : f32 to vector<8x128xf32>
    %cst_0 = arith.constant 0.000000e+00 : f32
    %1 = vector.broadcast %cst_0 : f32 to vector<8x128xf32>
    %c0 = arith.constant 0 : index
    %c0_1 = arith.constant 0 : index
    %2 = vector.load %arg1[%c0, %c0_1] : memref<8x128xbf16, #tpu.memory_space<vmem>>, vector<8x128xbf16>
    %c0_2 = arith.constant 0 : index
    %c0_3 = arith.constant 0 : index
    %c0_4 = arith.constant 0 : index
    %3 = vector.load %arg4[%c0_2, %c0_3, %c0_4] : memref<3x128x128xbf16, #tpu.memory_space<vmem>>, vector<1x128x128xbf16>
    %4 = vector.shape_cast %3 : vector<1x128x128xbf16> to vector<128x128xbf16>
    %cst_5 = arith.constant dense<0.000000e+00> : vector<8x128xf32>
    %5 = tpu.matmul %2, %4, %cst_5 {dimension_numbers = #tpu.dot_dimension_numbers<[1], [0], [0], [1], [0, 0, 1, 1], [], []>} : vector<8x128xbf16>, vector<128x128xbf16>, vector<8x128xf32> -> vector<8x128xf32>
    %6 = arith.addf %0, %5 : vector<8x128xf32>
    %c0_6 = arith.constant 0 : index
    %c0_7 = arith.constant 0 : index
    %c0_8 = arith.constant 0 : index
    %7 = vector.load %arg5[%c0_6, %c0_7, %c0_8] : memref<3x128x128xbf16, #tpu.memory_space<vmem>>, vector<1x128x128xbf16>
    %8 = vector.shape_cast %7 : vector<1x128x128xbf16> to vector<128x128xbf16>
    %cst_9 = arith.constant dense<0.000000e+00> : vector<8x128xf32>
    %9 = tpu.matmul %2, %8, %cst_9 {dimension_numbers = #tpu.dot_dimension_numbers<[1], [0], [0], [1], [0, 0, 1, 1], [], []>} : vector<8x128xbf16>, vector<128x128xbf16>, vector<8x128xf32> -> vector<8x128xf32>
    %10 = arith.addf %1, %9 : vector<8x128xf32>
    %c0_10 = arith.constant 0 : index
    %c0_11 = arith.constant 0 : index
    %11 = vector.load %arg2[%c0_10, %c0_11] : memref<8x128xbf16, #tpu.memory_space<vmem>>, vector<8x128xbf16>
    %c1 = arith.constant 1 : index
    %c0_12 = arith.constant 0 : index
    %c0_13 = arith.constant 0 : index
    %12 = vector.load %arg4[%c1, %c0_12, %c0_13] : memref<3x128x128xbf16, #tpu.memory_space<vmem>>, vector<1x128x128xbf16>
    %13 = vector.shape_cast %12 : vector<1x128x128xbf16> to vector<128x128xbf16>
    %cst_14 = arith.constant dense<0.000000e+00> : vector<8x128xf32>
    %14 = tpu.matmul %11, %13, %cst_14 {dimension_numbers = #tpu.dot_dimension_numbers<[1], [0], [0], [1], [0, 0, 1, 1], [], []>} : vector<8x128xbf16>, vector<128x128xbf16>, vector<8x128xf32> -> vector<8x128xf32>
    %15 = arith.addf %6, %14 : vector<8x128xf32>
    %c1_15 = arith.constant 1 : index
    %c0_16 = arith.constant 0 : index
    %c0_17 = arith.constant 0 : index
    %16 = vector.load %arg5[%c1_15, %c0_16, %c0_17] : memref<3x128x128xbf16, #tpu.memory_space<vmem>>, vector<1x128x128xbf16>
    %17 = vector.shape_cast %16 : vector<1x128x128xbf16> to vector<128x128xbf16>
    %cst_18 = arith.constant dense<0.000000e+00> : vector<8x128xf32>
    %18 = tpu.matmul %11, %17, %cst_18 {dimension_numbers = #tpu.dot_dimension_numbers<[1], [0], [0], [1], [0, 0, 1, 1], [], []>} : vector<8x128xbf16>, vector<128x128xbf16>, vector<8x128xf32> -> vector<8x128xf32>
    %19 = arith.addf %10, %18 : vector<8x128xf32>
    %c0_19 = arith.constant 0 : index
    %c0_20 = arith.constant 0 : index
    %20 = vector.load %arg3[%c0_19, %c0_20] : memref<8x128xbf16, #tpu.memory_space<vmem>>, vector<8x128xbf16>
    %c2 = arith.constant 2 : index
    %c0_21 = arith.constant 0 : index
    %c0_22 = arith.constant 0 : index
    %21 = vector.load %arg4[%c2, %c0_21, %c0_22] : memref<3x128x128xbf16, #tpu.memory_space<vmem>>, vector<1x128x128xbf16>
    %22 = vector.shape_cast %21 : vector<1x128x128xbf16> to vector<128x128xbf16>
    %cst_23 = arith.constant dense<0.000000e+00> : vector<8x128xf32>
    %23 = tpu.matmul %20, %22, %cst_23 {dimension_numbers = #tpu.dot_dimension_numbers<[1], [0], [0], [1], [0, 0, 1, 1], [], []>} : vector<8x128xbf16>, vector<128x128xbf16>, vector<8x128xf32> -> vector<8x128xf32>
    %24 = arith.addf %15, %23 : vector<8x128xf32>
    %c2_24 = arith.constant 2 : index
    %c0_25 = arith.constant 0 : index
    %c0_26 = arith.constant 0 : index
    %25 = vector.load %arg5[%c2_24, %c0_25, %c0_26] : memref<3x128x128xbf16, #tpu.memory_space<vmem>>, vector<1x128x128xbf16>
    %26 = vector.shape_cast %25 : vector<1x128x128xbf16> to vector<128x128xbf16>
    %cst_27 = arith.constant dense<0.000000e+00> : vector<8x128xf32>
    %27 = tpu.matmul %20, %26, %cst_27 {dimension_numbers = #tpu.dot_dimension_numbers<[1], [0], [0], [1], [0, 0, 1, 1], [], []>} : vector<8x128xbf16>, vector<128x128xbf16>, vector<8x128xf32> -> vector<8x128xf32>
    %28 = arith.addf %19, %27 : vector<8x128xf32>
    %c0_28 = arith.constant 0 : index
    %c0_29 = arith.constant 0 : index
    %29 = vector.load %arg6[%c0_28, %c0_29] : memref<1x128xf32, #tpu.memory_space<vmem>>, vector<1x128xf32>
    %30 = vector.broadcast %29 : vector<1x128xf32> to vector<8x128xf32>
    %31 = arith.addf %24, %30 : vector<8x128xf32>
    %c0_30 = arith.constant 0 : index
    %c0_31 = arith.constant 0 : index
    %32 = vector.load %arg7[%c0_30, %c0_31] : memref<1x128xf32, #tpu.memory_space<vmem>>, vector<1x128xf32>
    %33 = vector.broadcast %32 : vector<1x128xf32> to vector<8x128xf32>
    %34 = arith.addf %28, %33 : vector<8x128xf32>
    %35 = arith.negf %34 : vector<8x128xf32>
    %36 = math.exp %35 : vector<8x128xf32>
    %cst_32 = arith.constant 1.000000e+00 : f32
    %37 = vector.broadcast %cst_32 : f32 to vector<8x128xf32>
    %38 = arith.addf %37, %36 : vector<8x128xf32>
    %39 = arith.divf %37, %38 : vector<8x128xf32>
    %40 = arith.mulf %31, %39 : vector<8x128xf32>
    %c0_33 = arith.constant 0 : index
    %c0_34 = arith.constant 0 : index
    %41 = vector.load %arg8[%c0_33, %c0_34] : memref<8x128xf32, #tpu.memory_space<vmem>>, vector<8x128xf32>
    tpu.vector_store %arg8[%c0_33, %c0_34], %40 {strides = array<i32>} : memref<8x128xf32, #tpu.memory_space<vmem>>, vector<8x128xf32>,
    return
  }
  func.func @transform_0(%arg0: i32) -> (i32, i32) {
    %c0_i32 = arith.constant 0 : i32
    %c0_i32_0 = arith.constant 0 : i32
    return %arg0, %c0_i32 : i32, i32
  }
  func.func @transform_1(%arg0: i32) -> (i32, i32) {
    %c0_i32 = arith.constant 0 : i32
    %c0_i32_0 = arith.constant 0 : i32
    return %arg0, %c0_i32 : i32, i32
  }
  func.func @transform_2(%arg0: i32) -> (i32, i32) {
    %c0_i32 = arith.constant 0 : i32
    %c0_i32_0 = arith.constant 0 : i32
    return %arg0, %c0_i32 : i32, i32
  }
  func.func @transform_3(%arg0: i32) -> (i32, i32, i32) {
    %c0_i32 = arith.constant 0 : i32
    %c0_i32_0 = arith.constant 0 : i32
    %c0_i32_1 = arith.constant 0 : i32
    %c0_i32_2 = arith.constant 0 : i32
    return %c0_i32, %c0_i32_0, %c0_i32_1 : i32, i32, i32
  }
  func.func @transform_4(%arg0: i32) -> (i32, i32, i32) {
    %c0_i32 = arith.constant 0 : i32
    %c0_i32_0 = arith.constant 0 : i32
    %c0_i32_1 = arith.constant 0 : i32
    %c0_i32_2 = arith.constant 0 : i32
    return %c0_i32, %c0_i32_0, %c0_i32_1 : i32, i32, i32
  }
  func.func @transform_5(%arg0: i32) -> (i32, i32) {
    %c0_i32 = arith.constant 0 : i32
    %c0_i32_0 = arith.constant 0 : i32
    %c0_i32_1 = arith.constant 0 : i32
    return %c0_i32, %c0_i32_0 : i32, i32
  }
  func.func @transform_6(%arg0: i32) -> (i32, i32) {
    %c0_i32 = arith.constant 0 : i32
    %c0_i32_0 = arith.constant 0 : i32
    %c0_i32_1 = arith.constant 0 : i32
    return %c0_i32, %c0_i32_0 : i32, i32
  }
  func.func @transform_7(%arg0: i32) -> (i32, i32) {
    %c0_i32 = arith.constant 0 : i32
    %c0_i32_0 = arith.constant 0 : i32
    return %arg0, %c0_i32 : i32, i32
  }
}

</mosaic_0001>

<llo_original>
// kernel: conv1d_subsampler_forward.2
$region0: #{conv1d_subsampler_forward.2}
  #allocation0 [shape = 'u32[]', space=smem, size = 0x4, offset = 0x4, fixed_abs, tag = 'smem constant byte address 0x4 - core index']
  #allocation1 [shape = 'u32[144,128]{1,0:T(1,128)}', space=vmem, size = 0x12000, scoped, tag = 'internal scratch']
  %s0 = inlined_call_operand.vmem [shape: bf16[16,128], index: 0, kind: input, shape index: {}]
  %s1 = inlined_call_operand.vmem [shape: bf16[16,128], index: 1, kind: input, shape index: {}]
  %s2 = inlined_call_operand.vmem [shape: bf16[16,128], index: 2, kind: input, shape index: {}]
  %s3 = inlined_call_operand.vmem [shape: bf16[3,128,128], index: 3, kind: input, shape index: {}]
  %s4 = inlined_call_operand.vmem [shape: bf16[3,128,128], index: 4, kind: input, shape index: {}]
  %s5 = inlined_call_operand.vmem [shape: f32[1,128], index: 5, kind: input, shape index: {}]
  %s6 = inlined_call_operand.vmem [shape: f32[1,128], index: 6, kind: input, shape index: {}]
  %s7 = inlined_call_operand.vmem [shape: f32[16,128], index: 7, kind: output, shape index: {}]
  %s8 = sld [smem:[#allocation0]]
  $region38: #{conv1d_subsampler_forward.2} parent=0
    _
  %s10 = ssub.s32 1, %s8
  %s11 = scalar_select 0, %s10, %s8
  // Predicated region
  $region2: #{conv1d_subsampler_forward.2} parent=0 // pred_check
    _
  $region3: #{conv1d_subsampler_forward.2} parent=0 // pred_check_branch
    %13 = sbr.rel (0) target = $region5
  $region4: #{conv1d_subsampler_forward.2} parent=0 // pred_region
    _
  $region5: #{conv1d_subsampler_forward.2} parent=0 // pred_fallthru
    _
  // Predicated region
  $region6: #{conv1d_subsampler_forward.2} parent=0 // pred_check
    _
  $region7: #{conv1d_subsampler_forward.2} parent=0 // pred_check_branch
    %15 = sbr.rel (0) target = $region9
  $region8: #{conv1d_subsampler_forward.2} parent=0 // pred_region
    _
  $region9: #{conv1d_subsampler_forward.2} parent=0 // pred_fallthru
    _
  // Predicated region
  $region10: #{conv1d_subsampler_forward.2} parent=0 // pred_check
    _
  $region11: #{conv1d_subsampler_forward.2} parent=0 // pred_check_branch
    %17 = sbr.rel (0) target = $region13
  $region12: #{conv1d_subsampler_forward.2} parent=0 // pred_region
    _
  $region13: #{conv1d_subsampler_forward.2} parent=0 // pred_fallthru
    _
  // Predicated region
  $region14: #{conv1d_subsampler_forward.2} parent=0 // pred_check
    _
  $region15: #{conv1d_subsampler_forward.2} parent=0 // pred_check_branch
    %19 = sbr.rel (0) target = $region17
  $region16: #{conv1d_subsampler_forward.2} parent=0 // pred_region
    _
  $region17: #{conv1d_subsampler_forward.2} parent=0 // pred_fallthru
    _
  // Predicated region
  $region18: #{conv1d_subsampler_forward.2} parent=0 // pred_check
    _
  $region19: #{conv1d_subsampler_forward.2} parent=0 // pred_check_branch
    %21 = sbr.rel (0) target = $region21
  $region20: #{conv1d_subsampler_forward.2} parent=0 // pred_region
    _
  $region21: #{conv1d_subsampler_forward.2} parent=0 // pred_fallthru
    _
  // Predicated region
  $region22: #{conv1d_subsampler_forward.2} parent=0 // pred_check
    _
  $region23: #{conv1d_subsampler_forward.2} parent=0 // pred_check_branch
    %23 = sbr.rel (0) target = $region25
  $region24: #{conv1d_subsampler_forward.2} parent=0 // pred_region
    _
  $region25: #{conv1d_subsampler_forward.2} parent=0 // pred_fallthru
    _
  // Predicated region
  $region26: #{conv1d_subsampler_forward.2} parent=0 // pred_check
    _
  $region27: #{conv1d_subsampler_forward.2} parent=0 // pred_check_branch
    %25 = sbr.rel (0) target = $region29
  $region28: #{conv1d_subsampler_forward.2} parent=0 // pred_region
    _
  $region29: #{conv1d_subsampler_forward.2} parent=0 // pred_fallthru
    _
  %v27 = vld [vmem:[%s0] sm:$0xf]
  %v28 = vld [vmem:[%s0 + $0x4] sm:$0xf]
  %v29 = vld [vmem:[%s3] sm:$0xf]
  %v30 = vld [vmem:[%s3 + $0x4] sm:$0xf]
  %v31 = vld [vmem:[%s3 + $0x8] sm:$0xf]
  %v32 = vld [vmem:[%s3 + $0xc] sm:$0xf]
  %v33 = vld [vmem:[%s3 + $0x10] sm:$0xf]
  %v34 = vld [vmem:[%s3 + $0x14] sm:$0xf]
  %v35 = vld [vmem:[%s3 + $0x18] sm:$0xf]
  %v36 = vld [vmem:[%s3 + $0x1c] sm:$0xf]
  %v37 = vld [vmem:[%s3 + $0x20] sm:$0xf]
  %v38 = vld [vmem:[%s3 + $0x24] sm:$0xf]
  %v39 = vld [vmem:[%s3 + $0x28] sm:$0xf]
  %v40 = vld [vmem:[%s3 + $0x2c] sm:$0xf]
  %v41 = vld [vmem:[%s3 + $0x30] sm:$0xf]
  %v42 = vld [vmem:[%s3 + $0x34] sm:$0xf]
  %v43 = vld [vmem:[%s3 + $0x38] sm:$0xf]
  %v44 = vld [vmem:[%s3 + $0x3c] sm:$0xf]
  %v45 = vld [vmem:[%s4] sm:$0xf]
  %v46 = vld [vmem:[%s4 + $0x4] sm:$0xf]
  %v47 = vld [vmem:[%s4 + $0x8] sm:$0xf]
  %v48 = vld [vmem:[%s4 + $0xc] sm:$0xf]
  %v49 = vld [vmem:[%s4 + $0x10] sm:$0xf]
  %v50 = vld [vmem:[%s4 + $0x14] sm:$0xf]
  %v51 = vld [vmem:[%s4 + $0x18] sm:$0xf]
  %v52 = vld [vmem:[%s4 + $0x1c] sm:$0xf]
  %v53 = vld [vmem:[%s4 + $0x20] sm:$0xf]
  %v54 = vld [vmem:[%s4 + $0x24] sm:$0xf]
  %v55 = vld [vmem:[%s4 + $0x28] sm:$0xf]
  %v56 = vld [vmem:[%s4 + $0x2c] sm:$0xf]
  %v57 = vld [vmem:[%s4 + $0x30] sm:$0xf]
  %v58 = vld [vmem:[%s4 + $0x34] sm:$0xf]
  %v59 = vld [vmem:[%s4 + $0x38] sm:$0xf]
  %v60 = vld [vmem:[%s4 + $0x3c] sm:$0xf]
  %v61 = vld [vmem:[%s1] sm:$0xf]
  %v62 = vld [vmem:[%s1 + $0x4] sm:$0xf]
  %s63 = scalar_lea.vmem %s3, 64
  %v64 = vld [vmem:[%s63] sm:$0xf]
  %v65 = vld [vmem:[%s63 + $0x4] sm:$0xf]
  %v66 = vld [vmem:[%s63 + $0x8] sm:$0xf]
  %v67 = vld [vmem:[%s63 + $0xc] sm:$0xf]
  %v68 = vld [vmem:[%s63 + $0x10] sm:$0xf]
  %v69 = vld [vmem:[%s63 + $0x14] sm:$0xf]
  %v70 = vld [vmem:[%s63 + $0x18] sm:$0xf]
  %v71 = vld [vmem:[%s63 + $0x1c] sm:$0xf]
  %v72 = vld [vmem:[%s63 + $0x20] sm:$0xf]
  %v73 = vld [vmem:[%s63 + $0x24] sm:$0xf]
  %v74 = vld [vmem:[%s63 + $0x28] sm:$0xf]
  %v75 = vld [vmem:[%s63 + $0x2c] sm:$0xf]
  %v76 = vld [vmem:[%s63 + $0x30] sm:$0xf]
  %v77 = vld [vmem:[%s63 + $0x34] sm:$0xf]
  %v78 = vld [vmem:[%s63 + $0x38] sm:$0xf]
  %v79 = vld [vmem:[%s63 + $0x3c] sm:$0xf]
  %v82 = vunpack.c.l.b16 %v61
  %v83 = vunpack.c.l.b16 %v62
  %v84 = vpack.c.b16 %v83, %v82
  %v102 = vunpack.c.l.b16 %v64
  %v103 = vunpack.c.l.b16 %v65
  %v104 = vunpack.c.l.b16 %v66
  %v105 = vunpack.c.l.b16 %v67
  %v106 = vunpack.c.l.b16 %v68
  %v107 = vunpack.c.l.b16 %v69
  %v108 = vunpack.c.l.b16 %v70
  %v109 = vunpack.c.l.b16 %v71
  %v110 = vunpack.c.l.b16 %v72
  %v111 = vunpack.c.l.b16 %v73
  %v112 = vunpack.c.l.b16 %v74
  %v113 = vunpack.c.l.b16 %v75
  %v114 = vunpack.c.l.b16 %v76
  %v115 = vunpack.c.l.b16 %v77
  %v116 = vunpack.c.l.b16 %v78
  %v117 = vunpack.c.l.b16 %v79
  %v118 = vpack.c.b16 %v103, %v102
  %v119 = vpack.c.b16 %v105, %v104
  %v120 = vpack.c.b16 %v107, %v106
  %v121 = vpack.c.b16 %v109, %v108
  %v122 = vpack.c.b16 %v111, %v110
  %v123 = vpack.c.b16 %v113, %v112
  %v124 = vpack.c.b16 %v115, %v114
  %v125 = vpack.c.b16 %v117, %v116
  %134 = vmatprep.subr.bf16.mxu0 0
  %135 = vmatpush1.bf16.msra.mxu0 %v118
  %136 = vmatprep.subr.bf16.mxu0 0
  %137 = vmatpush1.bf16.msra.mxu0 %v119
  %138 = vmatprep.subr.bf16.mxu0 0
  %139 = vmatpush1.bf16.msra.mxu0 %v120
  %140 = vmatprep.subr.bf16.mxu0 0
  %141 = vmatpush1.bf16.msra.mxu0 %v121
  %142 = vmatprep.subr.bf16.mxu0 0
  %143 = vmatpush1.bf16.msra.mxu0 %v122
  %144 = vmatprep.subr.bf16.mxu0 0
  %145 = vmatpush1.bf16.msra.mxu0 %v123
  %146 = vmatprep.subr.bf16.mxu0 0
  %147 = vmatpush1.bf16.msra.mxu0 %v124
  %148 = vmatprep.subr.bf16.mxu0 0
  %149 = vmatpush1.bf16.msra.mxu0 %v125
  %150 = vmatprep.subr.bf16.mxu0 0
  %151 = vmatpush1.bf16.msra.mxu0 0
  %152 = vmatprep.subr.bf16.mxu0 0
  %153 = vmatpush1.bf16.msra.mxu0 0
  %154 = vmatprep.subr.bf16.mxu0 0
  %155 = vmatpush1.bf16.msra.mxu0 0
  %156 = vmatprep.subr.bf16.mxu0 0
  %157 = vmatpush1.bf16.msra.mxu0 0
  %158 = vmatprep.subr.bf16.mxu0 0
  %159 = vmatpush1.bf16.msra.mxu0 0
  %160 = vmatprep.subr.bf16.mxu0 0
  %161 = vmatpush1.bf16.msra.mxu0 0
  %162 = vmatprep.subr.bf16.mxu0 0
  %163 = vmatpush1.bf16.msra.mxu0 0
  %164 = vmatprep.subr.bf16.mxu0 0
  %165 = vmatpush1.bf16.msra.mxu0 0
  %166 = vmatprep.mubr.bf16.mxu0 0
  %167 = vmatmul.mubr.bf16.gmra.mrb[0].mxu0 %v84
  %v168 = vpop.f32.mrb[0].mxu0
  %v169 = vadd.f32 0.0, %v168
  %v170 = vpop.f32.mrb[0].mxu0
  %v171 = vpop.f32.mrb[0].mxu0
  %v172 = vadd.f32 0.0, %v171
  %v173 = vpop.f32.mrb[0].mxu0
  %174 = vdwg.mxu0
  %v177 = vunpack.c.l.b16 %v27
  %v178 = vunpack.c.l.b16 %v28
  %v179 = vpack.c.b16 %v178, %v177
  %v197 = vunpack.c.l.b16 %v29
  %v198 = vunpack.c.l.b16 %v30
  %v199 = vunpack.c.l.b16 %v31
  %v200 = vunpack.c.l.b16 %v32
  %v201 = vunpack.c.l.b16 %v33
  %v202 = vunpack.c.l.b16 %v34
  %v203 = vunpack.c.l.b16 %v35
  %v204 = vunpack.c.l.b16 %v36
  %v205 = vunpack.c.l.b16 %v37
  %v206 = vunpack.c.l.b16 %v38
  %v207 = vunpack.c.l.b16 %v39
  %v208 = vunpack.c.l.b16 %v40
  %v209 = vunpack.c.l.b16 %v41
  %v210 = vunpack.c.l.b16 %v42
  %v211 = vunpack.c.l.b16 %v43
  %v212 = vunpack.c.l.b16 %v44
  %v213 = vpack.c.b16 %v198, %v197
  %v214 = vpack.c.b16 %v200, %v199
  %v215 = vpack.c.b16 %v202, %v201
  %v216 = vpack.c.b16 %v204, %v203
  %v217 = vpack.c.b16 %v206, %v205
  %v218 = vpack.c.b16 %v208, %v207
  %v219 = vpack.c.b16 %v210, %v209
  %v220 = vpack.c.b16 %v212, %v211
  %229 = vmatprep.subr.bf16.mxu0 0
  %230 = vmatpush1.bf16.msra.mxu0 %v213
  %231 = vmatprep.subr.bf16.mxu0 0
  %232 = vmatpush1.bf16.msra.mxu0 %v214
  %233 = vmatprep.subr.bf16.mxu0 0
  %234 = vmatpush1.bf16.msra.mxu0 %v215
  %235 = vmatprep.subr.bf16.mxu0 0
  %236 = vmatpush1.bf16.msra.mxu0 %v216
  %237 = vmatprep.subr.bf16.mxu0 0
  %238 = vmatpush1.bf16.msra.mxu0 %v217
  %239 = vmatprep.subr.bf16.mxu0 0
  %240 = vmatpush1.bf16.msra.mxu0 %v218
  %241 = vmatprep.subr.bf16.mxu0 0
  %242 = vmatpush1.bf16.msra.mxu0 %v219
  %243 = vmatprep.subr.bf16.mxu0 0
  %244 = vmatpush1.bf16.msra.mxu0 %v220
  %245 = vmatprep.subr.bf16.mxu0 0
  %246 = vmatpush1.bf16.msra.mxu0 0
  %247 = vmatprep.subr.bf16.mxu0 0
  %248 = vmatpush1.bf16.msra.mxu0 0
  %249 = vmatprep.subr.bf16.mxu0 0
  %250 = vmatpush1.bf16.msra.mxu0 0
  %251 = vmatprep.subr.bf16.mxu0 0
  %252 = vmatpush1.bf16.msra.mxu0 0
  %253 = vmatprep.subr.bf16.mxu0 0
  %254 = vmatpush1.bf16.msra.mxu0 0
  %255 = vmatprep.subr.bf16.mxu0 0
  %256 = vmatpush1.bf16.msra.mxu0 0
  %257 = vmatprep.subr.bf16.mxu0 0
  %258 = vmatpush1.bf16.msra.mxu0 0
  %259 = vmatprep.subr.bf16.mxu0 0
  %260 = vmatpush1.bf16.msra.mxu0 0
  %261 = vmatprep.mubr.bf16.mxu0 0
  %262 = vmatmul.mubr.bf16.gmra.mrb[0].mxu0 %v179
  %v263 = vpop.f32.mrb[0].mxu0
  %v264 = vadd.f32 %v169, %v263
  %v265 = vpop.f32.mrb[0].mxu0
  %v266 = vpop.f32.mrb[0].mxu0
  %v267 = vadd.f32 %v172, %v266
  %v268 = vpop.f32.mrb[0].mxu0
  %269 = vdwg.mxu0
  %s270 = scalar_lea.vmem %s4, 64
  %v271 = vld [vmem:[%s270] sm:$0xf]
  %v272 = vld [vmem:[%s270 + $0x4] sm:$0xf]
  %v273 = vld [vmem:[%s270 + $0x8] sm:$0xf]
  %v274 = vld [vmem:[%s270 + $0xc] sm:$0xf]
  %v275 = vld [vmem:[%s270 + $0x10] sm:$0xf]
  %v276 = vld [vmem:[%s270 + $0x14] sm:$0xf]
  %v277 = vld [vmem:[%s270 + $0x18] sm:$0xf]
  %v278 = vld [vmem:[%s270 + $0x1c] sm:$0xf]
  %v279 = vld [vmem:[%s270 + $0x20] sm:$0xf]
  %v280 = vld [vmem:[%s270 + $0x24] sm:$0xf]
  %v281 = vld [vmem:[%s270 + $0x28] sm:$0xf]
  %v282 = vld [vmem:[%s270 + $0x2c] sm:$0xf]
  %v283 = vld [vmem:[%s270 + $0x30] sm:$0xf]
  %v284 = vld [vmem:[%s270 + $0x34] sm:$0xf]
  %v285 = vld [vmem:[%s270 + $0x38] sm:$0xf]
  %v286 = vld [vmem:[%s270 + $0x3c] sm:$0xf]
  %v303 = vunpack.c.l.b16 %v271
  %v304 = vunpack.c.l.b16 %v272
  %v305 = vunpack.c.l.b16 %v273
  %v306 = vunpack.c.l.b16 %v274
  %v307 = vunpack.c.l.b16 %v275
  %v308 = vunpack.c.l.b16 %v276
  %v309 = vunpack.c.l.b16 %v277
  %v310 = vunpack.c.l.b16 %v278
  %v311 = vunpack.c.l.b16 %v279
  %v312 = vunpack.c.l.b16 %v280
  %v313 = vunpack.c.l.b16 %v281
  %v314 = vunpack.c.l.b16 %v282
  %v315 = vunpack.c.l.b16 %v283
  %v316 = vunpack.c.l.b16 %v284
  %v317 = vunpack.c.l.b16 %v285
  %v318 = vunpack.c.l.b16 %v286
  %v319 = vpack.c.b16 %v304, %v303
  %v320 = vpack.c.b16 %v306, %v305
  %v321 = vpack.c.b16 %v308, %v307
  %v322 = vpack.c.b16 %v310, %v309
  %v323 = vpack.c.b16 %v312, %v311
  %v324 = vpack.c.b16 %v314, %v313
  %v325 = vpack.c.b16 %v316, %v315
  %v326 = vpack.c.b16 %v318, %v317
  %335 = vmatprep.subr.bf16.mxu0 0
  %336 = vmatpush1.bf16.msra.mxu0 %v319
  %337 = vmatprep.subr.bf16.mxu0 0
  %338 = vmatpush1.bf16.msra.mxu0 %v320
  %339 = vmatprep.subr.bf16.mxu0 0
  %340 = vmatpush1.bf16.msra.mxu0 %v321
  %341 = vmatprep.subr.bf16.mxu0 0
  %342 = vmatpush1.bf16.msra.mxu0 %v322
  %343 = vmatprep.subr.bf16.mxu0 0
  %344 = vmatpush1.bf16.msra.mxu0 %v323
  %345 = vmatprep.subr.bf16.mxu0 0
  %346 = vmatpush1.bf16.msra.mxu0 %v324
  %347 = vmatprep.subr.bf16.mxu0 0
  %348 = vmatpush1.bf16.msra.mxu0 %v325
  %349 = vmatprep.subr.bf16.mxu0 0
  %350 = vmatpush1.bf16.msra.mxu0 %v326
  %351 = vmatprep.subr.bf16.mxu0 0
  %352 = vmatpush1.bf16.msra.mxu0 0
  %353 = vmatprep.subr.bf16.mxu0 0
  %354 = vmatpush1.bf16.msra.mxu0 0
  %355 = vmatprep.subr.bf16.mxu0 0
  %356 = vmatpush1.bf16.msra.mxu0 0
  %357 = vmatprep.subr.bf16.mxu0 0
  %358 = vmatpush1.bf16.msra.mxu0 0
  %359 = vmatprep.subr.bf16.mxu0 0
  %360 = vmatpush1.bf16.msra.mxu0 0
  %361 = vmatprep.subr.bf16.mxu0 0
  %362 = vmatpush1.bf16.msra.mxu0 0
  %363 = vmatprep.subr.bf16.mxu0 0
  %364 = vmatpush1.bf16.msra.mxu0 0
  %365 = vmatprep.subr.bf16.mxu0 0
  %366 = vmatpush1.bf16.msra.mxu0 0
  %367 = vmatprep.mubr.bf16.mxu0 0
  %368 = vmatmul.mubr.bf16.gmra.mrb[0].mxu0 %v84
  %v369 = vpop.f32.mrb[0].mxu0
  %v370 = vadd.f32 0.0, %v369
  %v371 = vpop.f32.mrb[0].mxu0
  %v372 = vpop.f32.mrb[0].mxu0
  %v373 = vadd.f32 0.0, %v372
  %v374 = vpop.f32.mrb[0].mxu0
  %375 = vdwg.mxu0
  %v392 = vunpack.c.l.b16 %v45
  %v393 = vunpack.c.l.b16 %v46
  %v394 = vunpack.c.l.b16 %v47
  %v395 = vunpack.c.l.b16 %v48
  %v396 = vunpack.c.l.b16 %v49
  %v397 = vunpack.c.l.b16 %v50
  %v398 = vunpack.c.l.b16 %v51
  %v399 = vunpack.c.l.b16 %v52
  %v400 = vunpack.c.l.b16 %v53
  %v401 = vunpack.c.l.b16 %v54
  %v402 = vunpack.c.l.b16 %v55
  %v403 = vunpack.c.l.b16 %v56
  %v404 = vunpack.c.l.b16 %v57
  %v405 = vunpack.c.l.b16 %v58
  %v406 = vunpack.c.l.b16 %v59
  %v407 = vunpack.c.l.b16 %v60
  %v408 = vpack.c.b16 %v393, %v392
  %v409 = vpack.c.b16 %v395, %v394
  %v410 = vpack.c.b16 %v397, %v396
  %v411 = vpack.c.b16 %v399, %v398
  %v412 = vpack.c.b16 %v401, %v400
  %v413 = vpack.c.b16 %v403, %v402
  %v414 = vpack.c.b16 %v405, %v404
  %v415 = vpack.c.b16 %v407, %v406
  %424 = vmatprep.subr.bf16.mxu0 0
  %425 = vmatpush1.bf16.msra.mxu0 %v408
  %426 = vmatprep.subr.bf16.mxu0 0
  %427 = vmatpush1.bf16.msra.mxu0 %v409
  %428 = vmatprep.subr.bf16.mxu0 0
  %429 = vmatpush1.bf16.msra.mxu0 %v410
  %430 = vmatprep.subr.bf16.mxu0 0
  %431 = vmatpush1.bf16.msra.mxu0 %v411
  %432 = vmatprep.subr.bf16.mxu0 0
  %433 = vmatpush1.bf16.msra.mxu0 %v412
  %434 = vmatprep.subr.bf16.mxu0 0
  %435 = vmatpush1.bf16.msra.mxu0 %v413
  %436 = vmatprep.subr.bf16.mxu0 0
  %437 = vmatpush1.bf16.msra.mxu0 %v414
  %438 = vmatprep.subr.bf16.mxu0 0
  %439 = vmatpush1.bf16.msra.mxu0 %v415
  %440 = vmatprep.subr.bf16.mxu0 0
  %441 = vmatpush1.bf16.msra.mxu0 0
  %442 = vmatprep.subr.bf16.mxu0 0
  %443 = vmatpush1.bf16.msra.mxu0 0
  %444 = vmatprep.subr.bf16.mxu0 0
  %445 = vmatpush1.bf16.msra.mxu0 0
  %446 = vmatprep.subr.bf16.mxu0 0
  %447 = vmatpush1.bf16.msra.mxu0 0
  %448 = vmatprep.subr.bf16.mxu0 0
  %449 = vmatpush1.bf16.msra.mxu0 0
  %450 = vmatprep.subr.bf16.mxu0 0
  %451 = vmatpush1.bf16.msra.mxu0 0
  %452 = vmatprep.subr.bf16.mxu0 0
  %453 = vmatpush1.bf16.msra.mxu0 0
  %454 = vmatprep.subr.bf16.mxu0 0
  %455 = vmatpush1.bf16.msra.mxu0 0
  %456 = vmatprep.mubr.bf16.mxu0 0
  %457 = vmatmul.mubr.bf16.gmra.mrb[0].mxu0 %v179
  %v458 = vpop.f32.mrb[0].mxu0
  %v459 = vadd.f32 %v370, %v458
  %v460 = vpop.f32.mrb[0].mxu0
  %v461 = vpop.f32.mrb[0].mxu0
  %v462 = vadd.f32 %v373, %v461
  %v463 = vpop.f32.mrb[0].mxu0
  %464 = vdwg.mxu0
  %v465 = vld [vmem:[%s2] sm:$0xf]
  %v466 = vld [vmem:[%s2 + $0x4] sm:$0xf]
  %s467 = scalar_lea.vmem %s3, 128
  %v468 = vld [vmem:[%s467] sm:$0xf]
  %v469 = vld [vmem:[%s467 + $0x4] sm:$0xf]
  %v470 = vld [vmem:[%s467 + $0x8] sm:$0xf]
  %v471 = vld [vmem:[%s467 + $0xc] sm:$0xf]
  %v472 = vld [vmem:[%s467 + $0x10] sm:$0xf]
  %v473 = vld [vmem:[%s467 + $0x14] sm:$0xf]
  %v474 = vld [vmem:[%s467 + $0x18] sm:$0xf]
  %v475 = vld [vmem:[%s467 + $0x1c] sm:$0xf]
  %v476 = vld [vmem:[%s467 + $0x20] sm:$0xf]
  %v477 = vld [vmem:[%s467 + $0x24] sm:$0xf]
  %v478 = vld [vmem:[%s467 + $0x28] sm:$0xf]
  %v479 = vld [vmem:[%s467 + $0x2c] sm:$0xf]
  %v480 = vld [vmem:[%s467 + $0x30] sm:$0xf]
  %v481 = vld [vmem:[%s467 + $0x34] sm:$0xf]
  %v482 = vld [vmem:[%s467 + $0x38] sm:$0xf]
  %v483 = vld [vmem:[%s467 + $0x3c] sm:$0xf]
  %v486 = vunpack.c.l.b16 %v465
  %v487 = vunpack.c.l.b16 %v466
  %v488 = vpack.c.b16 %v487, %v486
  %v506 = vunpack.c.l.b16 %v468
  %v507 = vunpack.c.l.b16 %v469
  %v508 = vunpack.c.l.b16 %v470
  %v509 = vunpack.c.l.b16 %v471
  %v510 = vunpack.c.l.b16 %v472
  %v511 = vunpack.c.l.b16 %v473
  %v512 = vunpack.c.l.b16 %v474
  %v513 = vunpack.c.l.b16 %v475
  %v514 = vunpack.c.l.b16 %v476
  %v515 = vunpack.c.l.b16 %v477
  %v516 = vunpack.c.l.b16 %v478
  %v517 = vunpack.c.l.b16 %v479
  %v518 = vunpack.c.l.b16 %v480
  %v519 = vunpack.c.l.b16 %v481
  %v520 = vunpack.c.l.b16 %v482
  %v521 = vunpack.c.l.b16 %v483
  %v522 = vpack.c.b16 %v507, %v506
  %v523 = vpack.c.b16 %v509, %v508
  %v524 = vpack.c.b16 %v511, %v510
  %v525 = vpack.c.b16 %v513, %v512
  %v526 = vpack.c.b16 %v515, %v514
  %v527 = vpack.c.b16 %v517, %v516
  %v528 = vpack.c.b16 %v519, %v518
  %v529 = vpack.c.b16 %v521, %v520
  %538 = vmatprep.subr.bf16.mxu0 0
  %539 = vmatpush1.bf16.msra.mxu0 %v522
  %540 = vmatprep.subr.bf16.mxu0 0
  %541 = vmatpush1.bf16.msra.mxu0 %v523
  %542 = vmatprep.subr.bf16.mxu0 0
  %543 = vmatpush1.bf16.msra.mxu0 %v524
  %544 = vmatprep.subr.bf16.mxu0 0
  %545 = vmatpush1.bf16.msra.mxu0 %v525
  %546 = vmatprep.subr.bf16.mxu0 0
  %547 = vmatpush1.bf16.msra.mxu0 %v526
  %548 = vmatprep.subr.bf16.mxu0 0
  %549 = vmatpush1.bf16.msra.mxu0 %v527
  %550 = vmatprep.subr.bf16.mxu0 0
  %551 = vmatpush1.bf16.msra.mxu0 %v528
  %552 = vmatprep.subr.bf16.mxu0 0
  %553 = vmatpush1.bf16.msra.mxu0 %v529
  %554 = vmatprep.subr.bf16.mxu0 0
  %555 = vmatpush1.bf16.msra.mxu0 0
  %556 = vmatprep.subr.bf16.mxu0 0
  %557 = vmatpush1.bf16.msra.mxu0 0
  %558 = vmatprep.subr.bf16.mxu0 0
  %559 = vmatpush1.bf16.msra.mxu0 0
  %560 = vmatprep.subr.bf16.mxu0 0
  %561 = vmatpush1.bf16.msra.mxu0 0
  %562 = vmatprep.subr.bf16.mxu0 0
  %563 = vmatpush1.bf16.msra.mxu0 0
  %564 = vmatprep.subr.bf16.mxu0 0
  %565 = vmatpush1.bf16.msra.mxu0 0
  %566 = vmatprep.subr.bf16.mxu0 0
  %567 = vmatpush1.bf16.msra.mxu0 0
  %568 = vmatprep.subr.bf16.mxu0 0
  %569 = vmatpush1.bf16.msra.mxu0 0
  %570 = vmatprep.mubr.bf16.mxu0 0
  %571 = vmatmul.mubr.bf16.gmra.mrb[0].mxu0 %v488
  %v572 = vpop.f32.mrb[0].mxu0
  %v573 = vadd.f32 0.0, %v572
  %v574 = vpop.f32.mrb[0].mxu0
  %v575 = vpop.f32.mrb[0].mxu0
  %v576 = vadd.f32 0.0, %v575
  %v577 = vpop.f32.mrb[0].mxu0
  %578 = vdwg.mxu0
  %v579 = vadd.f32 %v264, %v573
  %v580 = vadd.f32 %v267, %v576
  %s581 = scalar_lea.vmem %s4, 128
  %v582 = vld [vmem:[%s581] sm:$0xf]
  %v583 = vld [vmem:[%s581 + $0x4] sm:$0xf]
  %v584 = vld [vmem:[%s581 + $0x8] sm:$0xf]
  %v585 = vld [vmem:[%s581 + $0xc] sm:$0xf]
  %v586 = vld [vmem:[%s581 + $0x10] sm:$0xf]
  %v587 = vld [vmem:[%s581 + $0x14] sm:$0xf]
  %v588 = vld [vmem:[%s581 + $0x18] sm:$0xf]
  %v589 = vld [vmem:[%s581 + $0x1c] sm:$0xf]
  %v590 = vld [vmem:[%s581 + $0x20] sm:$0xf]
  %v591 = vld [vmem:[%s581 + $0x24] sm:$0xf]
  %v592 = vld [vmem:[%s581 + $0x28] sm:$0xf]
  %v593 = vld [vmem:[%s581 + $0x2c] sm:$0xf]
  %v594 = vld [vmem:[%s581 + $0x30] sm:$0xf]
  %v595 = vld [vmem:[%s581 + $0x34] sm:$0xf]
  %v596 = vld [vmem:[%s581 + $0x38] sm:$0xf]
  %v597 = vld [vmem:[%s581 + $0x3c] sm:$0xf]
  %v614 = vunpack.c.l.b16 %v582
  %v615 = vunpack.c.l.b16 %v583
  %v616 = vunpack.c.l.b16 %v584
  %v617 = vunpack.c.l.b16 %v585
  %v618 = vunpack.c.l.b16 %v586
  %v619 = vunpack.c.l.b16 %v587
  %v620 = vunpack.c.l.b16 %v588
  %v621 = vunpack.c.l.b16 %v589
  %v622 = vunpack.c.l.b16 %v590
  %v623 = vunpack.c.l.b16 %v591
  %v624 = vunpack.c.l.b16 %v592
  %v625 = vunpack.c.l.b16 %v593
  %v626 = vunpack.c.l.b16 %v594
  %v627 = vunpack.c.l.b16 %v595
  %v628 = vunpack.c.l.b16 %v596
  %v629 = vunpack.c.l.b16 %v597
  %v630 = vpack.c.b16 %v615, %v614
  %v631 = vpack.c.b16 %v617, %v616
  %v632 = vpack.c.b16 %v619, %v618
  %v633 = vpack.c.b16 %v621, %v620
  %v634 = vpack.c.b16 %v623, %v622
  %v635 = vpack.c.b16 %v625, %v624
  %v636 = vpack.c.b16 %v627, %v626
  %v637 = vpack.c.b16 %v629, %v628
  %646 = vmatprep.subr.bf16.mxu0 0
  %647 = vmatpush1.bf16.msra.mxu0 %v630
  %648 = vmatprep.subr.bf16.mxu0 0
  %649 = vmatpush1.bf16.msra.mxu0 %v631
  %650 = vmatprep.subr.bf16.mxu0 0
  %651 = vmatpush1.bf16.msra.mxu0 %v632
  %652 = vmatprep.subr.bf16.mxu0 0
  %653 = vmatpush1.bf16.msra.mxu0 %v633
  %654 = vmatprep.subr.bf16.mxu0 0
  %655 = vmatpush1.bf16.msra.mxu0 %v634
  %656 = vmatprep.subr.bf16.mxu0 0
  %657 = vmatpush1.bf16.msra.mxu0 %v635
  %658 = vmatprep.subr.bf16.mxu0 0
  %659 = vmatpush1.bf16.msra.mxu0 %v636
  %660 = vmatprep.subr.bf16.mxu0 0
  %661 = vmatpush1.bf16.msra.mxu0 %v637
  %662 = vmatprep.subr.bf16.mxu0 0
  %663 = vmatpush1.bf16.msra.mxu0 0
  %664 = vmatprep.subr.bf16.mxu0 0
  %665 = vmatpush1.bf16.msra.mxu0 0
  %666 = vmatprep.subr.bf16.mxu0 0
  %667 = vmatpush1.bf16.msra.mxu0 0
  %668 = vmatprep.subr.bf16.mxu0 0
  %669 = vmatpush1.bf16.msra.mxu0 0
  %670 = vmatprep.subr.bf16.mxu0 0
  %671 = vmatpush1.bf16.msra.mxu0 0
  %672 = vmatprep.subr.bf16.mxu0 0
  %673 = vmatpush1.bf16.msra.mxu0 0
  %674 = vmatprep.subr.bf16.mxu0 0
  %675 = vmatpush1.bf16.msra.mxu0 0
  %676 = vmatprep.subr.bf16.mxu0 0
  %677 = vmatpush1.bf16.msra.mxu0 0
  %678 = vmatprep.mubr.bf16.mxu0 0
  %679 = vmatmul.mubr.bf16.gmra.mrb[0].mxu0 %v488
  %v680 = vpop.f32.mrb[0].mxu0
  %v681 = vadd.f32 0.0, %v680
  %v682 = vpop.f32.mrb[0].mxu0
  %v683 = vpop.f32.mrb[0].mxu0
  %v684 = vadd.f32 0.0, %v683
  %v685 = vpop.f32.mrb[0].mxu0
  %686 = vdwg.mxu0
  %v687 = vadd.f32 %v459, %v681
  %v688 = vadd.f32 %v462, %v684
  %v689 = vld [vmem:[%s5] sm:$0x1]
  %v691 = vlaneseq
  %v692 = vshrl.u32 %v691, 7
  %v693 = vsub.s32 0, %v692
  %v694 = vrot.slane %v689, %v693
  %v696 = vadd.f32 %v579, %v694
  %v697 = vadd.f32 %v580, %v694
  %v698 = vld [vmem:[%s6] sm:$0x1]
  %v700 = vlaneseq
  %v701 = vshrl.u32 %v700, 7
  %v702 = vsub.s32 0, %v701
  %v703 = vrot.slane %v698, %v702
  %v705 = vadd.f32 %v687, %v703
  %v706 = vadd.f32 %v688, %v703
  %v707 = vxor.u32 %v705, 2147483648
  %v708 = vxor.u32 %v706, 2147483648
  %v709 = vmul.f32 %v707, 1.442695
  %v710 = vpow.pop %v709
  %v711 = vmul.f32 %v708, 1.442695
  %v712 = vpow.pop %v711
  %v713 = vadd.f32 %v710, 1.0
  %v714 = vadd.f32 %v712, 1.0
  %v715 = vrcp.pop %v713
  %v716 = vmul.f32 1.0, %v715
  %v717 = vrcp.pop %v714
  %v718 = vmul.f32 1.0, %v717
  %v719 = vmul.f32 %v696, %v716
  %v720 = vmul.f32 %v697, %v718
  %721 = vst [vmem:[%s7] sm:$0xff] %v719
  %722 = vst [vmem:[%s7 + $0x8] sm:$0xff] %v720
  // Predicated region
  $region30: #{conv1d_subsampler_forward.2} parent=0 // pred_check
    _
  $region31: #{conv1d_subsampler_forward.2} parent=0 // pred_check_branch
    %724 = sbr.rel (0) target = $region33
  $region32: #{conv1d_subsampler_forward.2} parent=0 // pred_region
    _
  $region33: #{conv1d_subsampler_forward.2} parent=0 // pred_fallthru
    _
  // Predicated region
  $region34: #{conv1d_subsampler_forward.2} parent=0 // pred_check
    _
  $region35: #{conv1d_subsampler_forward.2} parent=0 // pred_check_branch
    %726 = sbr.rel (0) target = $region37
  $region36: #{conv1d_subsampler_forward.2} parent=0 // pred_region
    _
  $region37: #{conv1d_subsampler_forward.2} parent=0 // pred_fallthru
    _

// kernel: conv1d_subsampler_forward.3
$region0: #{conv1d_subsampler_forward.3}
  #allocation0 [shape = 'u32[]', space=smem, size = 0x4, offset = 0x4, fixed_abs, tag = 'smem constant byte address 0x4 - core index']
  #allocation1 [shape = 'u32[144,128]{1,0:T(1,128)}', space=vmem, size = 0x12000, scoped, tag = 'internal scratch']
  %s0 = inlined_call_operand.vmem [shape: bf16[8,128], index: 0, kind: input, shape index: {}]
  %s1 = inlined_call_operand.vmem [shape: bf16[8,128], index: 1, kind: input, shape index: {}]
  %s2 = inlined_call_operand.vmem [shape: bf16[8,128], index: 2, kind: input, shape index: {}]
  %s3 = inlined_call_operand.vmem [shape: bf16[3,128,128], index: 3, kind: input, shape index: {}]
  %s4 = inlined_call_operand.vmem [shape: bf16[3,128,128], index: 4, kind: input, shape index: {}]
  %s5 = inlined_call_operand.vmem [shape: f32[1,128], index: 5, kind: input, shape index: {}]
  %s6 = inlined_call_operand.vmem [shape: f32[1,128], index: 6, kind: input, shape index: {}]
  %s7 = inlined_call_operand.vmem [shape: f32[8,128], index: 7, kind: output, shape index: {}]
  %s8 = sld [smem:[#allocation0]]
  $region38: #{conv1d_subsampler_forward.3} parent=0
    _
  %s10 = ssub.s32 1, %s8
  %s11 = scalar_select 0, %s10, %s8
  // Predicated region
  $region2: #{conv1d_subsampler_forward.3} parent=0 // pred_check
    _
  $region3: #{conv1d_subsampler_forward.3} parent=0 // pred_check_branch
    %13 = sbr.rel (0) target = $region5
  $region4: #{conv1d_subsampler_forward.3} parent=0 // pred_region
    _
  $region5: #{conv1d_subsampler_forward.3} parent=0 // pred_fallthru
    _
  // Predicated region
  $region6: #{conv1d_subsampler_forward.3} parent=0 // pred_check
    _
  $region7: #{conv1d_subsampler_forward.3} parent=0 // pred_check_branch
    %15 = sbr.rel (0) target = $region9
  $region8: #{conv1d_subsampler_forward.3} parent=0 // pred_region
    _
  $region9: #{conv1d_subsampler_forward.3} parent=0 // pred_fallthru
    _
  // Predicated region
  $region10: #{conv1d_subsampler_forward.3} parent=0 // pred_check
    _
  $region11: #{conv1d_subsampler_forward.3} parent=0 // pred_check_branch
    %17 = sbr.rel (0) target = $region13
  $region12: #{conv1d_subsampler_forward.3} parent=0 // pred_region
    _
  $region13: #{conv1d_subsampler_forward.3} parent=0 // pred_fallthru
    _
  // Predicated region
  $region14: #{conv1d_subsampler_forward.3} parent=0 // pred_check
    _
  $region15: #{conv1d_subsampler_forward.3} parent=0 // pred_check_branch
    %19 = sbr.rel (0) target = $region17
  $region16: #{conv1d_subsampler_forward.3} parent=0 // pred_region
    _
  $region17: #{conv1d_subsampler_forward.3} parent=0 // pred_fallthru
    _
  // Predicated region
  $region18: #{conv1d_subsampler_forward.3} parent=0 // pred_check
    _
  $region19: #{conv1d_subsampler_forward.3} parent=0 // pred_check_branch
    %21 = sbr.rel (0) target = $region21
  $region20: #{conv1d_subsampler_forward.3} parent=0 // pred_region
    _
  $region21: #{conv1d_subsampler_forward.3} parent=0 // pred_fallthru
    _
  // Predicated region
  $region22: #{conv1d_subsampler_forward.3} parent=0 // pred_check
    _
  $region23: #{conv1d_subsampler_forward.3} parent=0 // pred_check_branch
    %23 = sbr.rel (0) target = $region25
  $region24: #{conv1d_subsampler_forward.3} parent=0 // pred_region
    _
  $region25: #{conv1d_subsampler_forward.3} parent=0 // pred_fallthru
    _
  // Predicated region
  $region26: #{conv1d_subsampler_forward.3} parent=0 // pred_check
    _
  $region27: #{conv1d_subsampler_forward.3} parent=0 // pred_check_branch
    %25 = sbr.rel (0) target = $region29
  $region28: #{conv1d_subsampler_forward.3} parent=0 // pred_region
    _
  $region29: #{conv1d_subsampler_forward.3} parent=0 // pred_fallthru
    _
  %v27 = vld [vmem:[%s0] sm:$0xf]
  %v28 = vld [vmem:[%s3] sm:$0xf]
  %v29 = vld [vmem:[%s3 + $0x4] sm:$0xf]
  %v30 = vld [vmem:[%s3 + $0x8] sm:$0xf]
  %v31 = vld [vmem:[%s3 + $0xc] sm:$0xf]
  %v32 = vld [vmem:[%s3 + $0x10] sm:$0xf]
  %v33 = vld [vmem:[%s3 + $0x14] sm:$0xf]
  %v34 = vld [vmem:[%s3 + $0x18] sm:$0xf]
  %v35 = vld [vmem:[%s3 + $0x1c] sm:$0xf]
  %v36 = vld [vmem:[%s3 + $0x20] sm:$0xf]
  %v37 = vld [vmem:[%s3 + $0x24] sm:$0xf]
  %v38 = vld [vmem:[%s3 + $0x28] sm:$0xf]
  %v39 = vld [vmem:[%s3 + $0x2c] sm:$0xf]
  %v40 = vld [vmem:[%s3 + $0x30] sm:$0xf]
  %v41 = vld [vmem:[%s3 + $0x34] sm:$0xf]
  %v42 = vld [vmem:[%s3 + $0x38] sm:$0xf]
  %v43 = vld [vmem:[%s3 + $0x3c] sm:$0xf]
  %v44 = vld [vmem:[%s4] sm:$0xf]
  %v45 = vld [vmem:[%s4 + $0x4] sm:$0xf]
  %v46 = vld [vmem:[%s4 + $0x8] sm:$0xf]
  %v47 = vld [vmem:[%s4 + $0xc] sm:$0xf]
  %v48 = vld [vmem:[%s4 + $0x10] sm:$0xf]
  %v49 = vld [vmem:[%s4 + $0x14] sm:$0xf]
  %v50 = vld [vmem:[%s4 + $0x18] sm:$0xf]
  %v51 = vld [vmem:[%s4 + $0x1c] sm:$0xf]
  %v52 = vld [vmem:[%s4 + $0x20] sm:$0xf]
  %v53 = vld [vmem:[%s4 + $0x24] sm:$0xf]
  %v54 = vld [vmem:[%s4 + $0x28] sm:$0xf]
  %v55 = vld [vmem:[%s4 + $0x2c] sm:$0xf]
  %v56 = vld [vmem:[%s4 + $0x30] sm:$0xf]
  %v57 = vld [vmem:[%s4 + $0x34] sm:$0xf]
  %v58 = vld [vmem:[%s4 + $0x38] sm:$0xf]
  %v59 = vld [vmem:[%s4 + $0x3c] sm:$0xf]
  %v60 = vld [vmem:[%s1] sm:$0xf]
  %s61 = scalar_lea.vmem %s3, 64
  %v62 = vld [vmem:[%s61] sm:$0xf]
  %v63 = vld [vmem:[%s61 + $0x4] sm:$0xf]
  %v64 = vld [vmem:[%s61 + $0x8] sm:$0xf]
  %v65 = vld [vmem:[%s61 + $0xc] sm:$0xf]
  %v66 = vld [vmem:[%s61 + $0x10] sm:$0xf]
  %v67 = vld [vmem:[%s61 + $0x14] sm:$0xf]
  %v68 = vld [vmem:[%s61 + $0x18] sm:$0xf]
  %v69 = vld [vmem:[%s61 + $0x1c] sm:$0xf]
  %v70 = vld [vmem:[%s61 + $0x20] sm:$0xf]
  %v71 = vld [vmem:[%s61 + $0x24] sm:$0xf]
  %v72 = vld [vmem:[%s61 + $0x28] sm:$0xf]
  %v73 = vld [vmem:[%s61 + $0x2c] sm:$0xf]
  %v74 = vld [vmem:[%s61 + $0x30] sm:$0xf]
  %v75 = vld [vmem:[%s61 + $0x34] sm:$0xf]
  %v76 = vld [vmem:[%s61 + $0x38] sm:$0xf]
  %v77 = vld [vmem:[%s61 + $0x3c] sm:$0xf]
  %v94 = vunpack.c.l.b16 %v62
  %v95 = vunpack.c.l.b16 %v63
  %v96 = vunpack.c.l.b16 %v64
  %v97 = vunpack.c.l.b16 %v65
  %v98 = vunpack.c.l.b16 %v66
  %v99 = vunpack.c.l.b16 %v67
  %v100 = vunpack.c.l.b16 %v68
  %v101 = vunpack.c.l.b16 %v69
  %v102 = vunpack.c.l.b16 %v70
  %v103 = vunpack.c.l.b16 %v71
  %v104 = vunpack.c.l.b16 %v72
  %v105 = vunpack.c.l.b16 %v73
  %v106 = vunpack.c.l.b16 %v74
  %v107 = vunpack.c.l.b16 %v75
  %v108 = vunpack.c.l.b16 %v76
  %v109 = vunpack.c.l.b16 %v77
  %v110 = vpack.c.b16 %v95, %v94
  %v111 = vpack.c.b16 %v97, %v96
  %v112 = vpack.c.b16 %v99, %v98
  %v113 = vpack.c.b16 %v101, %v100
  %v114 = vpack.c.b16 %v103, %v102
  %v115 = vpack.c.b16 %v105, %v104
  %v116 = vpack.c.b16 %v107, %v106
  %v117 = vpack.c.b16 %v109, %v108
  %126 = vmatprep.subr.bf16.mxu0 0
  %127 = vmatpush1.bf16.msra.mxu0 %v110
  %128 = vmatprep.subr.bf16.mxu0 0
  %129 = vmatpush1.bf16.msra.mxu0 %v111
  %130 = vmatprep.subr.bf16.mxu0 0
  %131 = vmatpush1.bf16.msra.mxu0 %v112
  %132 = vmatprep.subr.bf16.mxu0 0
  %133 = vmatpush1.bf16.msra.mxu0 %v113
  %134 = vmatprep.subr.bf16.mxu0 0
  %135 = vmatpush1.bf16.msra.mxu0 %v114
  %136 = vmatprep.subr.bf16.mxu0 0
  %137 = vmatpush1.bf16.msra.mxu0 %v115
  %138 = vmatprep.subr.bf16.mxu0 0
  %139 = vmatpush1.bf16.msra.mxu0 %v116
  %140 = vmatprep.subr.bf16.mxu0 0
  %141 = vmatpush1.bf16.msra.mxu0 %v117
  %142 = vmatprep.subr.bf16.mxu0 0
  %143 = vmatpush1.bf16.msra.mxu0 0
  %144 = vmatprep.subr.bf16.mxu0 0
  %145 = vmatpush1.bf16.msra.mxu0 0
  %146 = vmatprep.subr.bf16.mxu0 0
  %147 = vmatpush1.bf16.msra.mxu0 0
  %148 = vmatprep.subr.bf16.mxu0 0
  %149 = vmatpush1.bf16.msra.mxu0 0
  %150 = vmatprep.subr.bf16.mxu0 0
  %151 = vmatpush1.bf16.msra.mxu0 0
  %152 = vmatprep.subr.bf16.mxu0 0
  %153 = vmatpush1.bf16.msra.mxu0 0
  %154 = vmatprep.subr.bf16.mxu0 0
  %155 = vmatpush1.bf16.msra.mxu0 0
  %156 = vmatprep.subr.bf16.mxu0 0
  %157 = vmatpush1.bf16.msra.mxu0 0
  %158 = vmatprep.mubr.bf16.mxu0 0
  %159 = vmatmul.mubr.bf16.gmra.mrb[0].mxu0 %v60
  %v160 = vpop.f32.mrb[0].mxu0
  %v161 = vadd.f32 0.0, %v160
  %v162 = vpop.f32.mrb[0].mxu0
  %v163 = vpop.f32.mrb[0].mxu0
  %v164 = vpop.f32.mrb[0].mxu0
  %165 = vdwg.mxu0
  %v182 = vunpack.c.l.b16 %v28
  %v183 = vunpack.c.l.b16 %v29
  %v184 = vunpack.c.l.b16 %v30
  %v185 = vunpack.c.l.b16 %v31
  %v186 = vunpack.c.l.b16 %v32
  %v187 = vunpack.c.l.b16 %v33
  %v188 = vunpack.c.l.b16 %v34
  %v189 = vunpack.c.l.b16 %v35
  %v190 = vunpack.c.l.b16 %v36
  %v191 = vunpack.c.l.b16 %v37
  %v192 = vunpack.c.l.b16 %v38
  %v193 = vunpack.c.l.b16 %v39
  %v194 = vunpack.c.l.b16 %v40
  %v195 = vunpack.c.l.b16 %v41
  %v196 = vunpack.c.l.b16 %v42
  %v197 = vunpack.c.l.b16 %v43
  %v198 = vpack.c.b16 %v183, %v182
  %v199 = vpack.c.b16 %v185, %v184
  %v200 = vpack.c.b16 %v187, %v186
  %v201 = vpack.c.b16 %v189, %v188
  %v202 = vpack.c.b16 %v191, %v190
  %v203 = vpack.c.b16 %v193, %v192
  %v204 = vpack.c.b16 %v195, %v194
  %v205 = vpack.c.b16 %v197, %v196
  %214 = vmatprep.subr.bf16.mxu0 0
  %215 = vmatpush1.bf16.msra.mxu0 %v198
  %216 = vmatprep.subr.bf16.mxu0 0
  %217 = vmatpush1.bf16.msra.mxu0 %v199
  %218 = vmatprep.subr.bf16.mxu0 0
  %219 = vmatpush1.bf16.msra.mxu0 %v200
  %220 = vmatprep.subr.bf16.mxu0 0
  %221 = vmatpush1.bf16.msra.mxu0 %v201
  %222 = vmatprep.subr.bf16.mxu0 0
  %223 = vmatpush1.bf16.msra.mxu0 %v202
  %224 = vmatprep.subr.bf16.mxu0 0
  %225 = vmatpush1.bf16.msra.mxu0 %v203
  %226 = vmatprep.subr.bf16.mxu0 0
  %227 = vmatpush1.bf16.msra.mxu0 %v204
  %228 = vmatprep.subr.bf16.mxu0 0
  %229 = vmatpush1.bf16.msra.mxu0 %v205
  %230 = vmatprep.subr.bf16.mxu0 0
  %231 = vmatpush1.bf16.msra.mxu0 0
  %232 = vmatprep.subr.bf16.mxu0 0
  %233 = vmatpush1.bf16.msra.mxu0 0
  %234 = vmatprep.subr.bf16.mxu0 0
  %235 = vmatpush1.bf16.msra.mxu0 0
  %236 = vmatprep.subr.bf16.mxu0 0
  %237 = vmatpush1.bf16.msra.mxu0 0
  %238 = vmatprep.subr.bf16.mxu0 0
  %239 = vmatpush1.bf16.msra.mxu0 0
  %240 = vmatprep.subr.bf16.mxu0 0
  %241 = vmatpush1.bf16.msra.mxu0 0
  %242 = vmatprep.subr.bf16.mxu0 0
  %243 = vmatpush1.bf16.msra.mxu0 0
  %244 = vmatprep.subr.bf16.mxu0 0
  %245 = vmatpush1.bf16.msra.mxu0 0
  %246 = vmatprep.mubr.bf16.mxu0 0
  %247 = vmatmul.mubr.bf16.gmra.mrb[0].mxu0 %v27
  %v248 = vpop.f32.mrb[0].mxu0
  %v249 = vadd.f32 %v161, %v248
  %v250 = vpop.f32.mrb[0].mxu0
  %v251 = vpop.f32.mrb[0].mxu0
  %v252 = vpop.f32.mrb[0].mxu0
  %253 = vdwg.mxu0
  %s254 = scalar_lea.vmem %s4, 64
  %v255 = vld [vmem:[%s254] sm:$0xf]
  %v256 = vld [vmem:[%s254 + $0x4] sm:$0xf]
  %v257 = vld [vmem:[%s254 + $0x8] sm:$0xf]
  %v258 = vld [vmem:[%s254 + $0xc] sm:$0xf]
  %v259 = vld [vmem:[%s254 + $0x10] sm:$0xf]
  %v260 = vld [vmem:[%s254 + $0x14] sm:$0xf]
  %v261 = vld [vmem:[%s254 + $0x18] sm:$0xf]
  %v262 = vld [vmem:[%s254 + $0x1c] sm:$0xf]
  %v263 = vld [vmem:[%s254 + $0x20] sm:$0xf]
  %v264 = vld [vmem:[%s254 + $0x24] sm:$0xf]
  %v265 = vld [vmem:[%s254 + $0x28] sm:$0xf]
  %v266 = vld [vmem:[%s254 + $0x2c] sm:$0xf]
  %v267 = vld [vmem:[%s254 + $0x30] sm:$0xf]
  %v268 = vld [vmem:[%s254 + $0x34] sm:$0xf]
  %v269 = vld [vmem:[%s254 + $0x38] sm:$0xf]
  %v270 = vld [vmem:[%s254 + $0x3c] sm:$0xf]
  %v287 = vunpack.c.l.b16 %v255
  %v288 = vunpack.c.l.b16 %v256
  %v289 = vunpack.c.l.b16 %v257
  %v290 = vunpack.c.l.b16 %v258
  %v291 = vunpack.c.l.b16 %v259
  %v292 = vunpack.c.l.b16 %v260
  %v293 = vunpack.c.l.b16 %v261
  %v294 = vunpack.c.l.b16 %v262
  %v295 = vunpack.c.l.b16 %v263
  %v296 = vunpack.c.l.b16 %v264
  %v297 = vunpack.c.l.b16 %v265
  %v298 = vunpack.c.l.b16 %v266
  %v299 = vunpack.c.l.b16 %v267
  %v300 = vunpack.c.l.b16 %v268
  %v301 = vunpack.c.l.b16 %v269
  %v302 = vunpack.c.l.b16 %v270
  %v303 = vpack.c.b16 %v288, %v287
  %v304 = vpack.c.b16 %v290, %v289
  %v305 = vpack.c.b16 %v292, %v291
  %v306 = vpack.c.b16 %v294, %v293
  %v307 = vpack.c.b16 %v296, %v295
  %v308 = vpack.c.b16 %v298, %v297
  %v309 = vpack.c.b16 %v300, %v299
  %v310 = vpack.c.b16 %v302, %v301
  %319 = vmatprep.subr.bf16.mxu0 0
  %320 = vmatpush1.bf16.msra.mxu0 %v303
  %321 = vmatprep.subr.bf16.mxu0 0
  %322 = vmatpush1.bf16.msra.mxu0 %v304
  %323 = vmatprep.subr.bf16.mxu0 0
  %324 = vmatpush1.bf16.msra.mxu0 %v305
  %325 = vmatprep.subr.bf16.mxu0 0
  %326 = vmatpush1.bf16.msra.mxu0 %v306
  %327 = vmatprep.subr.bf16.mxu0 0
  %328 = vmatpush1.bf16.msra.mxu0 %v307
  %329 = vmatprep.subr.bf16.mxu0 0
  %330 = vmatpush1.bf16.msra.mxu0 %v308
  %331 = vmatprep.subr.bf16.mxu0 0
  %332 = vmatpush1.bf16.msra.mxu0 %v309
  %333 = vmatprep.subr.bf16.mxu0 0
  %334 = vmatpush1.bf16.msra.mxu0 %v310
  %335 = vmatprep.subr.bf16.mxu0 0
  %336 = vmatpush1.bf16.msra.mxu0 0
  %337 = vmatprep.subr.bf16.mxu0 0
  %338 = vmatpush1.bf16.msra.mxu0 0
  %339 = vmatprep.subr.bf16.mxu0 0
  %340 = vmatpush1.bf16.msra.mxu0 0
  %341 = vmatprep.subr.bf16.mxu0 0
  %342 = vmatpush1.bf16.msra.mxu0 0
  %343 = vmatprep.subr.bf16.mxu0 0
  %344 = vmatpush1.bf16.msra.mxu0 0
  %345 = vmatprep.subr.bf16.mxu0 0
  %346 = vmatpush1.bf16.msra.mxu0 0
  %347 = vmatprep.subr.bf16.mxu0 0
  %348 = vmatpush1.bf16.msra.mxu0 0
  %349 = vmatprep.subr.bf16.mxu0 0
  %350 = vmatpush1.bf16.msra.mxu0 0
  %351 = vmatprep.mubr.bf16.mxu0 0
  %352 = vmatmul.mubr.bf16.gmra.mrb[0].mxu0 %v60
  %v353 = vpop.f32.mrb[0].mxu0
  %v354 = vadd.f32 0.0, %v353
  %v355 = vpop.f32.mrb[0].mxu0
  %v356 = vpop.f32.mrb[0].mxu0
  %v357 = vpop.f32.mrb[0].mxu0
  %358 = vdwg.mxu0
  %v375 = vunpack.c.l.b16 %v44
  %v376 = vunpack.c.l.b16 %v45
  %v377 = vunpack.c.l.b16 %v46
  %v378 = vunpack.c.l.b16 %v47
  %v379 = vunpack.c.l.b16 %v48
  %v380 = vunpack.c.l.b16 %v49
  %v381 = vunpack.c.l.b16 %v50
  %v382 = vunpack.c.l.b16 %v51
  %v383 = vunpack.c.l.b16 %v52
  %v384 = vunpack.c.l.b16 %v53
  %v385 = vunpack.c.l.b16 %v54
  %v386 = vunpack.c.l.b16 %v55
  %v387 = vunpack.c.l.b16 %v56
  %v388 = vunpack.c.l.b16 %v57
  %v389 = vunpack.c.l.b16 %v58
  %v390 = vunpack.c.l.b16 %v59
  %v391 = vpack.c.b16 %v376, %v375
  %v392 = vpack.c.b16 %v378, %v377
  %v393 = vpack.c.b16 %v380, %v379
  %v394 = vpack.c.b16 %v382, %v381
  %v395 = vpack.c.b16 %v384, %v383
  %v396 = vpack.c.b16 %v386, %v385
  %v397 = vpack.c.b16 %v388, %v387
  %v398 = vpack.c.b16 %v390, %v389
  %407 = vmatprep.subr.bf16.mxu0 0
  %408 = vmatpush1.bf16.msra.mxu0 %v391
  %409 = vmatprep.subr.bf16.mxu0 0
  %410 = vmatpush1.bf16.msra.mxu0 %v392
  %411 = vmatprep.subr.bf16.mxu0 0
  %412 = vmatpush1.bf16.msra.mxu0 %v393
  %413 = vmatprep.subr.bf16.mxu0 0
  %414 = vmatpush1.bf16.msra.mxu0 %v394
  %415 = vmatprep.subr.bf16.mxu0 0
  %416 = vmatpush1.bf16.msra.mxu0 %v395
  %417 = vmatprep.subr.bf16.mxu0 0
  %418 = vmatpush1.bf16.msra.mxu0 %v396
  %419 = vmatprep.subr.bf16.mxu0 0
  %420 = vmatpush1.bf16.msra.mxu0 %v397
  %421 = vmatprep.subr.bf16.mxu0 0
  %422 = vmatpush1.bf16.msra.mxu0 %v398
  %423 = vmatprep.subr.bf16.mxu0 0
  %424 = vmatpush1.bf16.msra.mxu0 0
  %425 = vmatprep.subr.bf16.mxu0 0
  %426 = vmatpush1.bf16.msra.mxu0 0
  %427 = vmatprep.subr.bf16.mxu0 0
  %428 = vmatpush1.bf16.msra.mxu0 0
  %429 = vmatprep.subr.bf16.mxu0 0
  %430 = vmatpush1.bf16.msra.mxu0 0
  %431 = vmatprep.subr.bf16.mxu0 0
  %432 = vmatpush1.bf16.msra.mxu0 0
  %433 = vmatprep.subr.bf16.mxu0 0
  %434 = vmatpush1.bf16.msra.mxu0 0
  %435 = vmatprep.subr.bf16.mxu0 0
  %436 = vmatpush1.bf16.msra.mxu0 0
  %437 = vmatprep.subr.bf16.mxu0 0
  %438 = vmatpush1.bf16.msra.mxu0 0
  %439 = vmatprep.mubr.bf16.mxu0 0
  %440 = vmatmul.mubr.bf16.gmra.mrb[0].mxu0 %v27
  %v441 = vpop.f32.mrb[0].mxu0
  %v442 = vadd.f32 %v354, %v441
  %v443 = vpop.f32.mrb[0].mxu0
  %v444 = vpop.f32.mrb[0].mxu0
  %v445 = vpop.f32.mrb[0].mxu0
  %446 = vdwg.mxu0
  %v447 = vld [vmem:[%s2] sm:$0xf]
  %s448 = scalar_lea.vmem %s3, 128
  %v449 = vld [vmem:[%s448] sm:$0xf]
  %v450 = vld [vmem:[%s448 + $0x4] sm:$0xf]
  %v451 = vld [vmem:[%s448 + $0x8] sm:$0xf]
  %v452 = vld [vmem:[%s448 + $0xc] sm:$0xf]
  %v453 = vld [vmem:[%s448 + $0x10] sm:$0xf]
  %v454 = vld [vmem:[%s448 + $0x14] sm:$0xf]
  %v455 = vld [vmem:[%s448 + $0x18] sm:$0xf]
  %v456 = vld [vmem:[%s448 + $0x1c] sm:$0xf]
  %v457 = vld [vmem:[%s448 + $0x20] sm:$0xf]
  %v458 = vld [vmem:[%s448 + $0x24] sm:$0xf]
  %v459 = vld [vmem:[%s448 + $0x28] sm:$0xf]
  %v460 = vld [vmem:[%s448 + $0x2c] sm:$0xf]
  %v461 = vld [vmem:[%s448 + $0x30] sm:$0xf]
  %v462 = vld [vmem:[%s448 + $0x34] sm:$0xf]
  %v463 = vld [vmem:[%s448 + $0x38] sm:$0xf]
  %v464 = vld [vmem:[%s448 + $0x3c] sm:$0xf]
  %v481 = vunpack.c.l.b16 %v449
  %v482 = vunpack.c.l.b16 %v450
  %v483 = vunpack.c.l.b16 %v451
  %v484 = vunpack.c.l.b16 %v452
  %v485 = vunpack.c.l.b16 %v453
  %v486 = vunpack.c.l.b16 %v454
  %v487 = vunpack.c.l.b16 %v455
  %v488 = vunpack.c.l.b16 %v456
  %v489 = vunpack.c.l.b16 %v457
  %v490 = vunpack.c.l.b16 %v458
  %v491 = vunpack.c.l.b16 %v459
  %v492 = vunpack.c.l.b16 %v460
  %v493 = vunpack.c.l.b16 %v461
  %v494 = vunpack.c.l.b16 %v462
  %v495 = vunpack.c.l.b16 %v463
  %v496 = vunpack.c.l.b16 %v464
  %v497 = vpack.c.b16 %v482, %v481
  %v498 = vpack.c.b16 %v484, %v483
  %v499 = vpack.c.b16 %v486, %v485
  %v500 = vpack.c.b16 %v488, %v487
  %v501 = vpack.c.b16 %v490, %v489
  %v502 = vpack.c.b16 %v492, %v491
  %v503 = vpack.c.b16 %v494, %v493
  %v504 = vpack.c.b16 %v496, %v495
  %513 = vmatprep.subr.bf16.mxu0 0
  %514 = vmatpush1.bf16.msra.mxu0 %v497
  %515 = vmatprep.subr.bf16.mxu0 0
  %516 = vmatpush1.bf16.msra.mxu0 %v498
  %517 = vmatprep.subr.bf16.mxu0 0
  %518 = vmatpush1.bf16.msra.mxu0 %v499
  %519 = vmatprep.subr.bf16.mxu0 0
  %520 = vmatpush1.bf16.msra.mxu0 %v500
  %521 = vmatprep.subr.bf16.mxu0 0
  %522 = vmatpush1.bf16.msra.mxu0 %v501
  %523 = vmatprep.subr.bf16.mxu0 0
  %524 = vmatpush1.bf16.msra.mxu0 %v502
  %525 = vmatprep.subr.bf16.mxu0 0
  %526 = vmatpush1.bf16.msra.mxu0 %v503
  %527 = vmatprep.subr.bf16.mxu0 0
  %528 = vmatpush1.bf16.msra.mxu0 %v504
  %529 = vmatprep.subr.bf16.mxu0 0
  %530 = vmatpush1.bf16.msra.mxu0 0
  %531 = vmatprep.subr.bf16.mxu0 0
  %532 = vmatpush1.bf16.msra.mxu0 0
  %533 = vmatprep.subr.bf16.mxu0 0
  %534 = vmatpush1.bf16.msra.mxu0 0
  %535 = vmatprep.subr.bf16.mxu0 0
  %536 = vmatpush1.bf16.msra.mxu0 0
  %537 = vmatprep.subr.bf16.mxu0 0
  %538 = vmatpush1.bf16.msra.mxu0 0
  %539 = vmatprep.subr.bf16.mxu0 0
  %540 = vmatpush1.bf16.msra.mxu0 0
  %541 = vmatprep.subr.bf16.mxu0 0
  %542 = vmatpush1.bf16.msra.mxu0 0
  %543 = vmatprep.subr.bf16.mxu0 0
  %544 = vmatpush1.bf16.msra.mxu0 0
  %545 = vmatprep.mubr.bf16.mxu0 0
  %546 = vmatmul.mubr.bf16.gmra.mrb[0].mxu0 %v447
  %v547 = vpop.f32.mrb[0].mxu0
  %v548 = vadd.f32 0.0, %v547
  %v549 = vpop.f32.mrb[0].mxu0
  %v550 = vpop.f32.mrb[0].mxu0
  %v551 = vpop.f32.mrb[0].mxu0
  %552 = vdwg.mxu0
  %v553 = vadd.f32 %v249, %v548
  %s554 = scalar_lea.vmem %s4, 128
  %v555 = vld [vmem:[%s554] sm:$0xf]
  %v556 = vld [vmem:[%s554 + $0x4] sm:$0xf]
  %v557 = vld [vmem:[%s554 + $0x8] sm:$0xf]
  %v558 = vld [vmem:[%s554 + $0xc] sm:$0xf]
  %v559 = vld [vmem:[%s554 + $0x10] sm:$0xf]
  %v560 = vld [vmem:[%s554 + $0x14] sm:$0xf]
  %v561 = vld [vmem:[%s554 + $0x18] sm:$0xf]
  %v562 = vld [vmem:[%s554 + $0x1c] sm:$0xf]
  %v563 = vld [vmem:[%s554 + $0x20] sm:$0xf]
  %v564 = vld [vmem:[%s554 + $0x24] sm:$0xf]
  %v565 = vld [vmem:[%s554 + $0x28] sm:$0xf]
  %v566 = vld [vmem:[%s554 + $0x2c] sm:$0xf]
  %v567 = vld [vmem:[%s554 + $0x30] sm:$0xf]
  %v568 = vld [vmem:[%s554 + $0x34] sm:$0xf]
  %v569 = vld [vmem:[%s554 + $0x38] sm:$0xf]
  %v570 = vld [vmem:[%s554 + $0x3c] sm:$0xf]
  %v587 = vunpack.c.l.b16 %v555
  %v588 = vunpack.c.l.b16 %v556
  %v589 = vunpack.c.l.b16 %v557
  %v590 = vunpack.c.l.b16 %v558
  %v591 = vunpack.c.l.b16 %v559
  %v592 = vunpack.c.l.b16 %v560
  %v593 = vunpack.c.l.b16 %v561
  %v594 = vunpack.c.l.b16 %v562
  %v595 = vunpack.c.l.b16 %v563
  %v596 = vunpack.c.l.b16 %v564
  %v597 = vunpack.c.l.b16 %v565
  %v598 = vunpack.c.l.b16 %v566
  %v599 = vunpack.c.l.b16 %v567
  %v600 = vunpack.c.l.b16 %v568
  %v601 = vunpack.c.l.b16 %v569
  %v602 = vunpack.c.l.b16 %v570
  %v603 = vpack.c.b16 %v588, %v587
  %v604 = vpack.c.b16 %v590, %v589
  %v605 = vpack.c.b16 %v592, %v591
  %v606 = vpack.c.b16 %v594, %v593
  %v607 = vpack.c.b16 %v596, %v595
  %v608 = vpack.c.b16 %v598, %v597
  %v609 = vpack.c.b16 %v600, %v599
  %v610 = vpack.c.b16 %v602, %v601
  %619 = vmatprep.subr.bf16.mxu0 0
  %620 = vmatpush1.bf16.msra.mxu0 %v603
  %621 = vmatprep.subr.bf16.mxu0 0
  %622 = vmatpush1.bf16.msra.mxu0 %v604
  %623 = vmatprep.subr.bf16.mxu0 0
  %624 = vmatpush1.bf16.msra.mxu0 %v605
  %625 = vmatprep.subr.bf16.mxu0 0
  %626 = vmatpush1.bf16.msra.mxu0 %v606
  %627 = vmatprep.subr.bf16.mxu0 0
  %628 = vmatpush1.bf16.msra.mxu0 %v607
  %629 = vmatprep.subr.bf16.mxu0 0
  %630 = vmatpush1.bf16.msra.mxu0 %v608
  %631 = vmatprep.subr.bf16.mxu0 0
  %632 = vmatpush1.bf16.msra.mxu0 %v609
  %633 = vmatprep.subr.bf16.mxu0 0
  %634 = vmatpush1.bf16.msra.mxu0 %v610
  %635 = vmatprep.subr.bf16.mxu0 0
  %636 = vmatpush1.bf16.msra.mxu0 0
  %637 = vmatprep.subr.bf16.mxu0 0
  %638 = vmatpush1.bf16.msra.mxu0 0
  %639 = vmatprep.subr.bf16.mxu0 0
  %640 = vmatpush1.bf16.msra.mxu0 0
  %641 = vmatprep.subr.bf16.mxu0 0
  %642 = vmatpush1.bf16.msra.mxu0 0
  %643 = vmatprep.subr.bf16.mxu0 0
  %644 = vmatpush1.bf16.msra.mxu0 0
  %645 = vmatprep.subr.bf16.mxu0 0
  %646 = vmatpush1.bf16.msra.mxu0 0
  %647 = vmatprep.subr.bf16.mxu0 0
  %648 = vmatpush1.bf16.msra.mxu0 0
  %649 = vmatprep.subr.bf16.mxu0 0
  %650 = vmatpush1.bf16.msra.mxu0 0
  %651 = vmatprep.mubr.bf16.mxu0 0
  %652 = vmatmul.mubr.bf16.gmra.mrb[0].mxu0 %v447
  %v653 = vpop.f32.mrb[0].mxu0
  %v654 = vadd.f32 0.0, %v653
  %v655 = vpop.f32.mrb[0].mxu0
  %v656 = vpop.f32.mrb[0].mxu0
  %v657 = vpop.f32.mrb[0].mxu0
  %658 = vdwg.mxu0
  %v659 = vadd.f32 %v442, %v654
  %v660 = vld [vmem:[%s5] sm:$0x1]
  %v662 = vlaneseq
  %v663 = vshrl.u32 %v662, 7
  %v664 = vsub.s32 0, %v663
  %v665 = vrot.slane %v660, %v664
  %v667 = vadd.f32 %v553, %v665
  %v668 = vld [vmem:[%s6] sm:$0x1]
  %v670 = vlaneseq
  %v671 = vshrl.u32 %v670, 7
  %v672 = vsub.s32 0, %v671
  %v673 = vrot.slane %v668, %v672
  %v675 = vadd.f32 %v659, %v673
  %v676 = vxor.u32 %v675, 2147483648
  %v677 = vmul.f32 %v676, 1.442695
  %v678 = vpow.pop %v677
  %v679 = vadd.f32 %v678, 1.0
  %v680 = vrcp.pop %v679
  %v681 = vmul.f32 1.0, %v680
  %v682 = vmul.f32 %v667, %v681
  %683 = vst [vmem:[%s7] sm:$0xff] %v682
  // Predicated region
  $region30: #{conv1d_subsampler_forward.3} parent=0 // pred_check
    _
  $region31: #{conv1d_subsampler_forward.3} parent=0 // pred_check_branch
    %685 = sbr.rel (0) target = $region33
  $region32: #{conv1d_subsampler_forward.3} parent=0 // pred_region
    _
  $region33: #{conv1d_subsampler_forward.3} parent=0 // pred_fallthru
    _
  // Predicated region
  $region34: #{conv1d_subsampler_forward.3} parent=0 // pred_check
    _
  $region35: #{conv1d_subsampler_forward.3} parent=0 // pred_check_branch
    %687 = sbr.rel (0) target = $region37
  $region36: #{conv1d_subsampler_forward.3} parent=0 // pred_region
    _
  $region37: #{conv1d_subsampler_forward.3} parent=0 // pred_fallthru
    _

</llo_original>
